<compile_context>
chip_gen: v5e
topology: v5e:2x2
jax: 0.10.0
libtpu: 0.0.40
codegen_flags: <defaults>
</compile_context>

<pallas_src>
import math
from functools import partial

import jax
import jax.numpy as jnp
from jax import lax
from jax.experimental import pallas as pl
from jax.experimental.pallas import tpu as pltpu

EPS = 1e-5                            # nn.BatchNorm2d default eps
TILE_M = 512                          # output rows (N*Ho*Wo) per grid step
VMEM_LIMIT_BYTES = 48 * 1024 * 1024   # explicit limit, headroom under v7x's 64 MiB


def _round_up(x, m):
    return (x + m - 1) // m * m


def _tile_rows(m):
    """Pick a row-tile size (multiple of 16) and the padded row count."""
    n_tiles = -(-m // TILE_M)
    tm = _round_up(-(-m // n_tiles), 16)
    return tm, tm * n_tiles


# ----------------------------------------------------------------------------
# Pallas kernels
# ----------------------------------------------------------------------------
def _conv_stats_kernel(x_ref, w_ref, b_ref, y_ref, ssum_ref, ssq_ref, *,
                       valid_rows, block_rows):
    # x_ref: (TM, K) bf16   w_ref: (K, Cout) bf16   b_ref: (1, Cout) f32
    # y_ref: (TM, Cout) f32 ; ssum/ssq: (1, 1, Cout) per-tile partial BN stats
    y = jnp.dot(x_ref[...], w_ref[...], preferred_element_type=jnp.float32)
    y = y + b_ref[...]
    y_ref[...] = y
    # mask rows that only exist because M was padded up to a tile multiple
    row = (pl.program_id(0) * block_rows
           + lax.broadcasted_iota(jnp.int32, (block_rows, 1), 0))
    ym = y * (row < valid_rows).astype(jnp.float32)
    ssum_ref[...] = jnp.sum(ym, axis=0, keepdims=True).reshape(1, 1, -1)
    ssq_ref[...] = jnp.sum(ym * ym, axis=0, keepdims=True).reshape(1, 1, -1)


def _bn_relu_kernel(y_ref, ssum_ref, ssq_ref, gamma_ref, beta_ref, o_ref, *, count):
    # Finalize batch statistics from the per-tile partials and normalize.
    inv = 1.0 / count
    mean = jnp.sum(ssum_ref[...], axis=0) * inv                 # (1, C)
    var = jnp.sum(ssq_ref[...], axis=0) * inv - mean * mean     # biased variance
    scale = gamma_ref[...] * lax.rsqrt(var + EPS)
    shift = beta_ref[...] - mean * scale
    o_ref[...] = jnp.maximum(y_ref[...] * scale + shift, 0.0)


def _bnrelu_conv_stats_kernel(x_ref, psum_ref, psq_ref, pgamma_ref, pbeta_ref,
                              w_ref, b_ref, y_ref, ssum_ref, ssq_ref, *,
                              prev_count, valid_rows, block_rows):
    # Fused: previous layer's BN+ReLU applied to its raw conv output, then the
    # 1x1 (padding-0) conv matmul + bias + partial stats of this layer.
    inv = 1.0 / prev_count
    pmean = jnp.sum(psum_ref[...], axis=0) * inv
    pvar = jnp.sum(psq_ref[...], axis=0) * inv - pmean * pmean
    pscale = pgamma_ref[...] * lax.rsqrt(pvar + EPS)
    pshift = pbeta_ref[...] - pmean * pscale
    a = jnp.maximum(x_ref[...] * pscale + pshift, 0.0).astype(jnp.bfloat16)
    y = jnp.dot(a, w_ref[...], preferred_element_type=jnp.float32) + b_ref[...]
    y_ref[...] = y
    row = (pl.program_id(0) * block_rows
           + lax.broadcasted_iota(jnp.int32, (block_rows, 1), 0))
    ym = y * (row < valid_rows).astype(jnp.float32)
    ssum_ref[...] = jnp.sum(ym, axis=0, keepdims=True).reshape(1, 1, -1)
    ssq_ref[...] = jnp.sum(ym * ym, axis=0, keepdims=True).reshape(1, 1, -1)


# ----------------------------------------------------------------------------
# Wrappers around pallas_call
# ----------------------------------------------------------------------------
_COMPILER_PARAMS = pltpu.CompilerParams(
    dimension_semantics=("parallel",),          # M axis -> megacore on v7x
    vmem_limit_bytes=VMEM_LIMIT_BYTES)


def _im2col(x, kh, kw, stride, padding):
    """NHWC activation -> (N*Ho*Wo, kh*kw*Cin) bf16 patch matrix."""
    n, h, w, cin = x.shape
    sh, sw = stride
    ph, pw = padding
    ho = (h + 2 * ph - kh) // sh + 1
    wo = (w + 2 * pw - kw) // sw + 1
    if ph or pw:
        x = jnp.pad(x, ((0, 0), (ph, ph), (pw, pw), (0, 0)))
    cols = []
    for i in range(kh):
        for j in range(kw):
            cols.append(x[:, i:i + sh * ho:sh, j:j + sw * wo:sw, :])
    patches = cols[0] if len(cols) == 1 else jnp.concatenate(cols, axis=-1)
    patches = patches.reshape(n * ho * wo, kh * kw * cin)
    # TODO(synk): stream the conv taps straight from the padded NHWC activation
    # (shifted index_maps / manual halo DMA) instead of materializing this slab.
    return patches.astype(jnp.bfloat16), (n, ho, wo)


def _conv_pass1_from_act(x_nhwc, lp, lc):
    """Pass 1: conv matmul + bias + per-tile partial BN statistics."""
    kh, kw = lc["k"]
    cin, cout = lc["cin"], lc["cout"]
    patches, (n, ho, wo) = _im2col(x_nhwc, kh, kw, lc["stride"], lc["pad"])
    m = n * ho * wo
    tm, m_pad = _tile_rows(m)
    if m_pad != m:
        patches = jnp.pad(patches, ((0, m_pad - m), (0, 0)))
    n_tiles = m_pad // tm
    k_dim = kh * kw * cin
    w2d = lp["w"].reshape(k_dim, cout).astype(jnp.bfloat16)
    bias = lp["b"].reshape(1, cout).astype(jnp.float32)
    y, ssum, ssq = pl.pallas_call(
        partial(_conv_stats_kernel, valid_rows=m, block_rows=tm),
        out_shape=(jax.ShapeDtypeStruct((m_pad, cout), jnp.float32),
                   jax.ShapeDtypeStruct((n_tiles, 1, cout), jnp.float32),
                   jax.ShapeDtypeStruct((n_tiles, 1, cout), jnp.float32)),
        grid=(n_tiles,),
        in_specs=[
            pl.BlockSpec((tm, k_dim), lambda i: (i, 0)),     # patch tile (pipelined)
            pl.BlockSpec((k_dim, cout), lambda i: (0, 0)),   # weights, VMEM-resident
            pl.BlockSpec((1, cout), lambda i: (0, 0)),       # conv bias, resident
        ],
        out_specs=(
            pl.BlockSpec((tm, cout), lambda i: (i, 0)),
            pl.BlockSpec((1, 1, cout), lambda i: (i, 0, 0)),
            pl.BlockSpec((1, 1, cout), lambda i: (i, 0, 0)),
        ),
        compiler_params=_COMPILER_PARAMS,
    )(patches, w2d, bias)
    return y, (ssum, ssq), m, m_pad, tm, (n, ho, wo)


def _bn_relu_pass2(y, stats, lp, m, m_pad, tm):
    """Pass 2: finalize BN statistics, normalize and ReLU (tiled over M)."""
    ssum, ssq = stats
    cout = y.shape[1]
    n_tiles = m_pad // tm
    gamma = lp["gamma"].reshape(1, cout).astype(jnp.float32)
    beta = lp["beta"].reshape(1, cout).astype(jnp.float32)
    return pl.pallas_call(
        partial(_bn_relu_kernel, count=float(m)),
        out_shape=jax.ShapeDtypeStruct((m_pad, cout), jnp.float32),
        grid=(n_tiles,),
        in_specs=[
            pl.BlockSpec((tm, cout), lambda i: (i, 0)),
            pl.BlockSpec((n_tiles, 1, cout), lambda i: (0, 0, 0)),
            pl.BlockSpec((n_tiles, 1, cout), lambda i: (0, 0, 0)),
            pl.BlockSpec((1, cout), lambda i: (0, 0)),
            pl.BlockSpec((1, cout), lambda i: (0, 0)),
        ],
        out_specs=pl.BlockSpec((tm, cout), lambda i: (i, 0)),
        compiler_params=_COMPILER_PARAMS,
    )(y, ssum, ssq, gamma, beta)


def _fused_1x1_pass1(y_prev, prev_stats, prev_lp, lp, m, m_pad, tm):
    """Previous layer's BN+ReLU fused into a 1x1 (pad 0, stride 1) conv pass 1."""
    psum, psq = prev_stats
    cin = y_prev.shape[1]
    cout = lp["w"].shape[-1]
    n_tiles = m_pad // tm
    w2d = lp["w"].reshape(cin, cout).astype(jnp.bfloat16)
    bias = lp["b"].reshape(1, cout).astype(jnp.float32)
    pgamma = prev_lp["gamma"].reshape(1, cin).astype(jnp.float32)
    pbeta = prev_lp["beta"].reshape(1, cin).astype(jnp.float32)
    y, ssum, ssq = pl.pallas_call(
        partial(_bnrelu_conv_stats_kernel, prev_count=float(m),
                valid_rows=m, block_rows=tm),
        out_shape=(jax.ShapeDtypeStruct((m_pad, cout), jnp.float32),
                   jax.ShapeDtypeStruct((n_tiles, 1, cout), jnp.float32),
                   jax.ShapeDtypeStruct((n_tiles, 1, cout), jnp.float32)),
        grid=(n_tiles,),
        in_specs=[
            pl.BlockSpec((tm, cin), lambda i: (i, 0)),            # raw y of prev layer
            pl.BlockSpec((n_tiles, 1, cin), lambda i: (0, 0, 0)), # prev partial sums
            pl.BlockSpec((n_tiles, 1, cin), lambda i: (0, 0, 0)), # prev partial sumsq
            pl.BlockSpec((1, cin), lambda i: (0, 0)),             # prev gamma
            pl.BlockSpec((1, cin), lambda i: (0, 0)),             # prev beta
            pl.BlockSpec((cin, cout), lambda i: (0, 0)),          # 1x1 weights
            pl.BlockSpec((1, cout), lambda i: (0, 0)),            # 1x1 bias
        ],
        out_specs=(
            pl.BlockSpec((tm, cout), lambda i: (i, 0)),
            pl.BlockSpec((1, 1, cout), lambda i: (i, 0, 0)),
            pl.BlockSpec((1, 1, cout), lambda i: (i, 0, 0)),
        ),
        compiler_params=_COMPILER_PARAMS,
    )(y_prev, psum, psq, pgamma, pbeta, w2d, bias)
    return y, (ssum, ssq)


def conv_bn_relu(x_nhwc, lp, lc):
    """One ConvBnRelu layer: conv -> BN(batch stats) -> ReLU.  NHWC in/out."""
    y, stats, m, m_pad, tm, (n, ho, wo) = _conv_pass1_from_act(x_nhwc, lp, lc)
    out = _bn_relu_pass2(y, stats, lp, m, m_pad, tm)
    return out[:m].reshape(n, ho, wo, lc["cout"])


# ----------------------------------------------------------------------------
# ConvBlock configuration, parameters and forward pass
# ----------------------------------------------------------------------------
def conv_block_config(in_chan, out_chan, kernel_size, downsample=True):
    if isinstance(kernel_size, int):
        kernel_size = (kernel_size, kernel_size)
    kh, kw = kernel_size
    if downsample:
        h_dim = in_chan // 2 if in_chan > 64 else 64
    else:
        h_dim = out_chan
    layers = [
        dict(cin=in_chan, cout=h_dim, k=(kh, kw), stride=(2, 2), pad=(kh // 2, kw // 2)),
        dict(cin=h_dim, cout=h_dim, k=(3, 3), stride=(1, 1), pad=(1, 1)),
        dict(cin=h_dim, cout=h_dim, k=(3, 3), stride=(1, 1), pad=(1, 1)),
    ]
    if h_dim != out_chan:   # 'down_sample' 1x1 ConvBnRelu
        layers.append(dict(cin=h_dim, cout=out_chan, k=(1, 1), stride=(1, 1), pad=(0, 0)))
    return layers


def build_params(key, cfg):
    """Deterministic synthetic params (Conv2d-like init; BN gamma=1, beta=0)."""
    params = []
    keys = jax.random.split(key, len(cfg))
    for k, lc in zip(keys, cfg):
        kh, kw = lc["k"]
        cin, cout = lc["cin"], lc["cout"]
        k1, k2 = jax.random.split(k)
        bound = 1.0 / math.sqrt(kh * kw * cin)
        params.append({
            "w": jax.random.uniform(k1, (kh, kw, cin, cout), jnp.float32, -bound, bound),
            "b": jax.random.uniform(k2, (cout,), jnp.float32, -bound, bound),
            "gamma": jnp.ones((cout,), jnp.float32),
            "beta": jnp.zeros((cout,), jnp.float32),
        })
    return params


def conv_block_forward(cfg, params, x_nchw):
    x = jnp.transpose(x_nchw, (0, 2, 3, 1)).astype(jnp.float32)   # NCHW -> NHWC
    i = 0
    while i < len(cfg):
        lc, lp = cfg[i], params[i]
        fuse_next = (i + 1 < len(cfg)
                     and cfg[i + 1]["k"] == (1, 1)
                     and cfg[i + 1]["stride"] == (1, 1)
                     and cfg[i + 1]["pad"] == (0, 0))
        if fuse_next:
            # conv_i pass1, then fuse its BN+ReLU into the 1x1 conv_{i+1}.
            nc, nparams = cfg[i + 1], params[i + 1]
            y, stats, m, m_pad, tm, (n, ho, wo) = _conv_pass1_from_act(x, lp, lc)
            y2, stats2 = _fused_1x1_pass1(y, stats, lp, nparams, m, m_pad, tm)
            out = _bn_relu_pass2(y2, stats2, nparams, m, m_pad, tm)
            x = out[:m].reshape(n, ho, wo, nc["cout"])
            i += 2
        else:
            x = conv_bn_relu(x, lp, lc)
            i += 1
    return jnp.transpose(x, (0, 3, 1, 2))                          # NHWC -> NCHW


# ----------------------------------------------------------------------------
if __name__ == "__main__":
    key = jax.random.PRNGKey(0)
    kp, kx = jax.random.split(key)

    # ConvBlock(in_chan=4, out_chan=32, kernel_size=(3,3), downsample=True)
    in_chan, out_chan, kernel_size = 4, 32, (3, 3)
    cfg = conv_block_config(in_chan, out_chan, kernel_size, downsample=True)
    params = build_params(kp, cfg)

    x = jax.random.normal(kx, (2, in_chan, 16, 16), jnp.float32)   # NCHW

    fwd = jax.jit(lambda p, xx: conv_block_forward(cfg, p, xx))
    out = jax.block_until_ready(fwd(params, x))

    # stride-2 first conv: 16x16 -> 8x8; final 1x1 down_sample -> 32 channels
    assert out.shape == (2, out_chan, 8, 8), out.shape
    assert bool(jnp.all(jnp.isfinite(out)))
    print("KERNEL_OK")
</pallas_src>

<mosaic_0001>
module attributes {stable_mosaic.version = 11 : i64} {
  func.func @_conv_stats_kernel(%arg0: i32, %arg1: memref<128x36xbf16, #tpu.memory_space<vmem>>, %arg2: memref<36x64xbf16, #tpu.memory_space<vmem>>, %arg3: memref<1x64xf32, #tpu.memory_space<vmem>>, %arg4: memref<128x64xf32, #tpu.memory_space<vmem>>, %arg5: memref<1x1x64xf32, #tpu.memory_space<vmem>>, %arg6: memref<1x1x64xf32, #tpu.memory_space<vmem>>) attributes {dimension_semantics = [#tpu.dimension_semantics<parallel>], iteration_bounds = array<i64: 1>, scalar_prefetch = 0 : i64, scratch_operands = 0 : i64, tpu.core_type = #tpu.core_type<tc>, window_params = [{transform_indices = @transform_0, window_bounds = array<i64: 128, 36>}, {pipeline_mode = #tpu.pipeline_mode<synchronous>, transform_indices = @transform_1, window_bounds = array<i64: 36, 64>}, {pipeline_mode = #tpu.pipeline_mode<synchronous>, transform_indices = @transform_2, window_bounds = array<i64: 1, 64>}, {transform_indices = @transform_3, window_bounds = array<i64: 128, 64>}, {transform_indices = @transform_4, window_bounds = array<i64: 1, 1, 64>}, {transform_indices = @transform_5, window_bounds = array<i64: 1, 1, 64>}]} {
    %c0 = arith.constant 0 : index
    %c0_0 = arith.constant 0 : index
    %0 = vector.load %arg1[%c0, %c0_0] : memref<128x36xbf16, #tpu.memory_space<vmem>>, vector<128x36xbf16>
    %c0_1 = arith.constant 0 : index
    %c0_2 = arith.constant 0 : index
    %1 = vector.load %arg2[%c0_1, %c0_2] : memref<36x64xbf16, #tpu.memory_space<vmem>>, vector<36x64xbf16>
    %cst = arith.constant dense<0.000000e+00> : vector<128x64xf32>
    %2 = tpu.matmul %0, %1, %cst {dimension_numbers = #tpu.dot_dimension_numbers<[1], [0], [0], [1], [0, 0, 1, 1], [], []>} : vector<128x36xbf16>, vector<36x64xbf16>, vector<128x64xf32> -> vector<128x64xf32>
    %c0_3 = arith.constant 0 : index
    %c0_4 = arith.constant 0 : index
    %3 = vector.load %arg3[%c0_3, %c0_4] : memref<1x64xf32, #tpu.memory_space<vmem>>, vector<1x64xf32>
    %4 = vector.broadcast %3 : vector<1x64xf32> to vector<128x64xf32>
    %5 = arith.addf %2, %4 : vector<128x64xf32>
    %c0_5 = arith.constant 0 : index
    %c0_6 = arith.constant 0 : index
    %6 = vector.load %arg4[%c0_5, %c0_6] : memref<128x64xf32, #tpu.memory_space<vmem>>, vector<128x64xf32>
    tpu.vector_store %arg4[%c0_5, %c0_6], %5 {strides = array<i32>} : memref<128x64xf32, #tpu.memory_space<vmem>>, vector<128x64xf32>,
    %c128_i32 = arith.constant 128 : i32
    %7 = arith.muli %arg0, %c128_i32 : i32
    %8 = tpu.iota {dimensions = array<i32: 0>} : vector<128x1xi32>
    %9 = vector.broadcast %7 : i32 to vector<128x1xi32>
    %10 = arith.addi %9, %8 : vector<128x1xi32>
    %c128_i32_7 = arith.constant 128 : i32
    %11 = vector.broadcast %c128_i32_7 : i32 to vector<128x1xi32>
    %12 = arith.cmpi slt, %10, %11 : vector<128x1xi32>
    %13 = arith.extui %12 : vector<128x1xi1> to vector<128x1xi32>
    %14 = arith.sitofp %13 : vector<128x1xi32> to vector<128x1xf32>
    %15 = vector.broadcast %14 : vector<128x1xf32> to vector<128x64xf32>
    %16 = arith.mulf %5, %15 : vector<128x64xf32>
    %cst_8 = arith.constant dense<0.000000e+00> : vector<64xf32>
    %17 = vector.multi_reduction <add>, %16, %cst_8 [0] : vector<128x64xf32> to vector<64xf32>
    %18 = vector.shape_cast %17 : vector<64xf32> to vector<1x64xf32>
    %19 = vector.shape_cast %18 : vector<1x64xf32> to vector<1x1x64xf32>
    %c0_9 = arith.constant 0 : index
    %c0_10 = arith.constant 0 : index
    %c0_11 = arith.constant 0 : index
    %20 = vector.load %arg5[%c0_9, %c0_10, %c0_11] : memref<1x1x64xf32, #tpu.memory_space<vmem>>, vector<1x1x64xf32>
    tpu.vector_store %arg5[%c0_9, %c0_10, %c0_11], %19 {strides = array<i32>} : memref<1x1x64xf32, #tpu.memory_space<vmem>>, vector<1x1x64xf32>,
    %21 = arith.mulf %16, %16 : vector<128x64xf32>
    %cst_12 = arith.constant dense<0.000000e+00> : vector<64xf32>
    %22 = vector.multi_reduction <add>, %21, %cst_12 [0] : vector<128x64xf32> to vector<64xf32>
    %23 = vector.shape_cast %22 : vector<64xf32> to vector<1x64xf32>
    %24 = vector.shape_cast %23 : vector<1x64xf32> to vector<1x1x64xf32>
    %c0_13 = arith.constant 0 : index
    %c0_14 = arith.constant 0 : index
    %c0_15 = arith.constant 0 : index
    %25 = vector.load %arg6[%c0_13, %c0_14, %c0_15] : memref<1x1x64xf32, #tpu.memory_space<vmem>>, vector<1x1x64xf32>
    tpu.vector_store %arg6[%c0_13, %c0_14, %c0_15], %24 {strides = array<i32>} : memref<1x1x64xf32, #tpu.memory_space<vmem>>, vector<1x1x64xf32>,
    return
  }
  func.func @transform_0(%arg0: i32) -> (i32, i32) {
    %c0_i32 = arith.constant 0 : i32
    %c0_i32_0 = arith.constant 0 : i32
    return %arg0, %c0_i32 : i32, i32
  }
  func.func @transform_1(%arg0: i32) -> (i32, i32) {
    %c0_i32 = arith.constant 0 : i32
    %c0_i32_0 = arith.constant 0 : i32
    %c0_i32_1 = arith.constant 0 : i32
    return %c0_i32, %c0_i32_0 : i32, i32
  }
  func.func @transform_2(%arg0: i32) -> (i32, i32) {
    %c0_i32 = arith.constant 0 : i32
    %c0_i32_0 = arith.constant 0 : i32
    %c0_i32_1 = arith.constant 0 : i32
    return %c0_i32, %c0_i32_0 : i32, i32
  }
  func.func @transform_3(%arg0: i32) -> (i32, i32) {
    %c0_i32 = arith.constant 0 : i32
    %c0_i32_0 = arith.constant 0 : i32
    return %arg0, %c0_i32 : i32, i32
  }
  func.func @transform_4(%arg0: i32) -> (i32, i32, i32) {
    %c0_i32 = arith.constant 0 : i32
    %c0_i32_0 = arith.constant 0 : i32
    %c0_i32_1 = arith.constant 0 : i32
    return %arg0, %c0_i32, %c0_i32_0 : i32, i32, i32
  }
  func.func @transform_5(%arg0: i32) -> (i32, i32, i32) {
    %c0_i32 = arith.constant 0 : i32
    %c0_i32_0 = arith.constant 0 : i32
    %c0_i32_1 = arith.constant 0 : i32
    return %arg0, %c0_i32, %c0_i32_0 : i32, i32, i32
  }
}

module attributes {stable_mosaic.version = 11 : i64} {
  func.func @_bn_relu_kernel(%arg0: i32, %arg1: memref<128x64xf32, #tpu.memory_space<vmem>>, %arg2: memref<1x1x64xf32, #tpu.memory_space<vmem>>, %arg3: memref<1x1x64xf32, #tpu.memory_space<vmem>>, %arg4: memref<1x64xf32, #tpu.memory_space<vmem>>, %arg5: memref<1x64xf32, #tpu.memory_space<vmem>>, %arg6: memref<128x64xf32, #tpu.memory_space<vmem>>) attributes {dimension_semantics = [#tpu.dimension_semantics<parallel>], iteration_bounds = array<i64: 1>, scalar_prefetch = 0 : i64, scratch_operands = 0 : i64, tpu.core_type = #tpu.core_type<tc>, window_params = [{transform_indices = @transform_0, window_bounds = array<i64: 128, 64>}, {pipeline_mode = #tpu.pipeline_mode<synchronous>, transform_indices = @transform_1, window_bounds = array<i64: 1, 1, 64>}, {pipeline_mode = #tpu.pipeline_mode<synchronous>, transform_indices = @transform_2, window_bounds = array<i64: 1, 1, 64>}, {pipeline_mode = #tpu.pipeline_mode<synchronous>, transform_indices = @transform_3, window_bounds = array<i64: 1, 64>}, {pipeline_mode = #tpu.pipeline_mode<synchronous>, transform_indices = @transform_4, window_bounds = array<i64: 1, 64>}, {transform_indices = @transform_5, window_bounds = array<i64: 128, 64>}]} {
    %c0 = arith.constant 0 : index
    %c0_0 = arith.constant 0 : index
    %c0_1 = arith.constant 0 : index
    %0 = vector.load %arg2[%c0, %c0_0, %c0_1] : memref<1x1x64xf32, #tpu.memory_space<vmem>>, vector<1x1x64xf32>
    %cst = arith.constant dense<0.000000e+00> : vector<1x64xf32>
    %1 = vector.multi_reduction <add>, %0, %cst [0] : vector<1x1x64xf32> to vector<1x64xf32>
    %cst_2 = arith.constant 7.812500e-03 : f32
    %2 = vector.broadcast %cst_2 : f32 to vector<1x64xf32>
    %3 = arith.mulf %1, %2 : vector<1x64xf32>
    %c0_3 = arith.constant 0 : index
    %c0_4 = arith.constant 0 : index
    %c0_5 = arith.constant 0 : index
    %4 = vector.load %arg3[%c0_3, %c0_4, %c0_5] : memref<1x1x64xf32, #tpu.memory_space<vmem>>, vector<1x1x64xf32>
    %cst_6 = arith.constant dense<0.000000e+00> : vector<1x64xf32>
    %5 = vector.multi_reduction <add>, %4, %cst_6 [0] : vector<1x1x64xf32> to vector<1x64xf32>
    %cst_7 = arith.constant 7.812500e-03 : f32
    %6 = vector.broadcast %cst_7 : f32 to vector<1x64xf32>
    %7 = arith.mulf %5, %6 : vector<1x64xf32>
    %8 = arith.mulf %3, %3 : vector<1x64xf32>
    %9 = arith.subf %7, %8 : vector<1x64xf32>
    %c0_8 = arith.constant 0 : index
    %c0_9 = arith.constant 0 : index
    %10 = vector.load %arg4[%c0_8, %c0_9] : memref<1x64xf32, #tpu.memory_space<vmem>>, vector<1x64xf32>
    %cst_10 = arith.constant 9.99999974E-6 : f32
    %11 = vector.broadcast %cst_10 : f32 to vector<1x64xf32>
    %12 = arith.addf %9, %11 : vector<1x64xf32>
    %13 = math.rsqrt %12 : vector<1x64xf32>
    %14 = arith.mulf %10, %13 : vector<1x64xf32>
    %c0_11 = arith.constant 0 : index
    %c0_12 = arith.constant 0 : index
    %15 = vector.load %arg5[%c0_11, %c0_12] : memref<1x64xf32, #tpu.memory_space<vmem>>, vector<1x64xf32>
    %16 = arith.mulf %3, %14 : vector<1x64xf32>
    %17 = arith.subf %15, %16 : vector<1x64xf32>
    %c0_13 = arith.constant 0 : index
    %c0_14 = arith.constant 0 : index
    %18 = vector.load %arg1[%c0_13, %c0_14] : memref<128x64xf32, #tpu.memory_space<vmem>>, vector<128x64xf32>
    %19 = vector.broadcast %14 : vector<1x64xf32> to vector<128x64xf32>
    %20 = arith.mulf %18, %19 : vector<128x64xf32>
    %21 = vector.broadcast %17 : vector<1x64xf32> to vector<128x64xf32>
    %22 = arith.addf %20, %21 : vector<128x64xf32>
    %cst_15 = arith.constant 0.000000e+00 : f32
    %23 = vector.broadcast %cst_15 : f32 to vector<128x64xf32>
    %24 = arith.maximumf %22, %23 : vector<128x64xf32>
    %c0_16 = arith.constant 0 : index
    %c0_17 = arith.constant 0 : index
    %25 = vector.load %arg6[%c0_16, %c0_17] : memref<128x64xf32, #tpu.memory_space<vmem>>, vector<128x64xf32>
    tpu.vector_store %arg6[%c0_16, %c0_17], %24 {strides = array<i32>} : memref<128x64xf32, #tpu.memory_space<vmem>>, vector<128x64xf32>,
    return
  }
  func.func @transform_0(%arg0: i32) -> (i32, i32) {
    %c0_i32 = arith.constant 0 : i32
    %c0_i32_0 = arith.constant 0 : i32
    return %arg0, %c0_i32 : i32, i32
  }
  func.func @transform_1(%arg0: i32) -> (i32, i32, i32) {
    %c0_i32 = arith.constant 0 : i32
    %c0_i32_0 = arith.constant 0 : i32
    %c0_i32_1 = arith.constant 0 : i32
    %c0_i32_2 = arith.constant 0 : i32
    return %c0_i32, %c0_i32_0, %c0_i32_1 : i32, i32, i32
  }
  func.func @transform_2(%arg0: i32) -> (i32, i32, i32) {
    %c0_i32 = arith.constant 0 : i32
    %c0_i32_0 = arith.constant 0 : i32
    %c0_i32_1 = arith.constant 0 : i32
    %c0_i32_2 = arith.constant 0 : i32
    return %c0_i32, %c0_i32_0, %c0_i32_1 : i32, i32, i32
  }
  func.func @transform_3(%arg0: i32) -> (i32, i32) {
    %c0_i32 = arith.constant 0 : i32
    %c0_i32_0 = arith.constant 0 : i32
    %c0_i32_1 = arith.constant 0 : i32
    return %c0_i32, %c0_i32_0 : i32, i32
  }
  func.func @transform_4(%arg0: i32) -> (i32, i32) {
    %c0_i32 = arith.constant 0 : i32
    %c0_i32_0 = arith.constant 0 : i32
    %c0_i32_1 = arith.constant 0 : i32
    return %c0_i32, %c0_i32_0 : i32, i32
  }
  func.func @transform_5(%arg0: i32) -> (i32, i32) {
    %c0_i32 = arith.constant 0 : i32
    %c0_i32_0 = arith.constant 0 : i32
    return %arg0, %c0_i32 : i32, i32
  }
}

module attributes {stable_mosaic.version = 11 : i64} {
  func.func @_conv_stats_kernel(%arg0: i32, %arg1: memref<128x576xbf16, #tpu.memory_space<vmem>>, %arg2: memref<576x64xbf16, #tpu.memory_space<vmem>>, %arg3: memref<1x64xf32, #tpu.memory_space<vmem>>, %arg4: memref<128x64xf32, #tpu.memory_space<vmem>>, %arg5: memref<1x1x64xf32, #tpu.memory_space<vmem>>, %arg6: memref<1x1x64xf32, #tpu.memory_space<vmem>>) attributes {dimension_semantics = [#tpu.dimension_semantics<parallel>], iteration_bounds = array<i64: 1>, scalar_prefetch = 0 : i64, scratch_operands = 0 : i64, tpu.core_type = #tpu.core_type<tc>, window_params = [{transform_indices = @transform_0, window_bounds = array<i64: 128, 576>}, {pipeline_mode = #tpu.pipeline_mode<synchronous>, transform_indices = @transform_1, window_bounds = array<i64: 576, 64>}, {pipeline_mode = #tpu.pipeline_mode<synchronous>, transform_indices = @transform_2, window_bounds = array<i64: 1, 64>}, {transform_indices = @transform_3, window_bounds = array<i64: 128, 64>}, {transform_indices = @transform_4, window_bounds = array<i64: 1, 1, 64>}, {transform_indices = @transform_5, window_bounds = array<i64: 1, 1, 64>}]} {
    %c0 = arith.constant 0 : index
    %c0_0 = arith.constant 0 : index
    %0 = vector.load %arg1[%c0, %c0_0] : memref<128x576xbf16, #tpu.memory_space<vmem>>, vector<128x576xbf16>
    %c0_1 = arith.constant 0 : index
    %c0_2 = arith.constant 0 : index
    %1 = vector.load %arg2[%c0_1, %c0_2] : memref<576x64xbf16, #tpu.memory_space<vmem>>, vector<576x64xbf16>
    %cst = arith.constant dense<0.000000e+00> : vector<128x64xf32>
    %2 = tpu.matmul %0, %1, %cst {dimension_numbers = #tpu.dot_dimension_numbers<[1], [0], [0], [1], [0, 0, 1, 1], [], []>} : vector<128x576xbf16>, vector<576x64xbf16>, vector<128x64xf32> -> vector<128x64xf32>
    %c0_3 = arith.constant 0 : index
    %c0_4 = arith.constant 0 : index
    %3 = vector.load %arg3[%c0_3, %c0_4] : memref<1x64xf32, #tpu.memory_space<vmem>>, vector<1x64xf32>
    %4 = vector.broadcast %3 : vector<1x64xf32> to vector<128x64xf32>
    %5 = arith.addf %2, %4 : vector<128x64xf32>
    %c0_5 = arith.constant 0 : index
    %c0_6 = arith.constant 0 : index
    %6 = vector.load %arg4[%c0_5, %c0_6] : memref<128x64xf32, #tpu.memory_space<vmem>>, vector<128x64xf32>
    tpu.vector_store %arg4[%c0_5, %c0_6], %5 {strides = array<i32>} : memref<128x64xf32, #tpu.memory_space<vmem>>, vector<128x64xf32>,
    %c128_i32 = arith.constant 128 : i32
    %7 = arith.muli %arg0, %c128_i32 : i32
    %8 = tpu.iota {dimensions = array<i32: 0>} : vector<128x1xi32>
    %9 = vector.broadcast %7 : i32 to vector<128x1xi32>
    %10 = arith.addi %9, %8 : vector<128x1xi32>
    %c128_i32_7 = arith.constant 128 : i32
    %11 = vector.broadcast %c128_i32_7 : i32 to vector<128x1xi32>
    %12 = arith.cmpi slt, %10, %11 : vector<128x1xi32>
    %13 = arith.extui %12 : vector<128x1xi1> to vector<128x1xi32>
    %14 = arith.sitofp %13 : vector<128x1xi32> to vector<128x1xf32>
    %15 = vector.broadcast %14 : vector<128x1xf32> to vector<128x64xf32>
    %16 = arith.mulf %5, %15 : vector<128x64xf32>
    %cst_8 = arith.constant dense<0.000000e+00> : vector<64xf32>
    %17 = vector.multi_reduction <add>, %16, %cst_8 [0] : vector<128x64xf32> to vector<64xf32>
    %18 = vector.shape_cast %17 : vector<64xf32> to vector<1x64xf32>
    %19 = vector.shape_cast %18 : vector<1x64xf32> to vector<1x1x64xf32>
    %c0_9 = arith.constant 0 : index
    %c0_10 = arith.constant 0 : index
    %c0_11 = arith.constant 0 : index
    %20 = vector.load %arg5[%c0_9, %c0_10, %c0_11] : memref<1x1x64xf32, #tpu.memory_space<vmem>>, vector<1x1x64xf32>
    tpu.vector_store %arg5[%c0_9, %c0_10, %c0_11], %19 {strides = array<i32>} : memref<1x1x64xf32, #tpu.memory_space<vmem>>, vector<1x1x64xf32>,
    %21 = arith.mulf %16, %16 : vector<128x64xf32>
    %cst_12 = arith.constant dense<0.000000e+00> : vector<64xf32>
    %22 = vector.multi_reduction <add>, %21, %cst_12 [0] : vector<128x64xf32> to vector<64xf32>
    %23 = vector.shape_cast %22 : vector<64xf32> to vector<1x64xf32>
    %24 = vector.shape_cast %23 : vector<1x64xf32> to vector<1x1x64xf32>
    %c0_13 = arith.constant 0 : index
    %c0_14 = arith.constant 0 : index
    %c0_15 = arith.constant 0 : index
    %25 = vector.load %arg6[%c0_13, %c0_14, %c0_15] : memref<1x1x64xf32, #tpu.memory_space<vmem>>, vector<1x1x64xf32>
    tpu.vector_store %arg6[%c0_13, %c0_14, %c0_15], %24 {strides = array<i32>} : memref<1x1x64xf32, #tpu.memory_space<vmem>>, vector<1x1x64xf32>,
    return
  }
  func.func @transform_0(%arg0: i32) -> (i32, i32) {
    %c0_i32 = arith.constant 0 : i32
    %c0_i32_0 = arith.constant 0 : i32
    return %arg0, %c0_i32 : i32, i32
  }
  func.func @transform_1(%arg0: i32) -> (i32, i32) {
    %c0_i32 = arith.constant 0 : i32
    %c0_i32_0 = arith.constant 0 : i32
    %c0_i32_1 = arith.constant 0 : i32
    return %c0_i32, %c0_i32_0 : i32, i32
  }
  func.func @transform_2(%arg0: i32) -> (i32, i32) {
    %c0_i32 = arith.constant 0 : i32
    %c0_i32_0 = arith.constant 0 : i32
    %c0_i32_1 = arith.constant 0 : i32
    return %c0_i32, %c0_i32_0 : i32, i32
  }
  func.func @transform_3(%arg0: i32) -> (i32, i32) {
    %c0_i32 = arith.constant 0 : i32
    %c0_i32_0 = arith.constant 0 : i32
    return %arg0, %c0_i32 : i32, i32
  }
  func.func @transform_4(%arg0: i32) -> (i32, i32, i32) {
    %c0_i32 = arith.constant 0 : i32
    %c0_i32_0 = arith.constant 0 : i32
    %c0_i32_1 = arith.constant 0 : i32
    return %arg0, %c0_i32, %c0_i32_0 : i32, i32, i32
  }
  func.func @transform_5(%arg0: i32) -> (i32, i32, i32) {
    %c0_i32 = arith.constant 0 : i32
    %c0_i32_0 = arith.constant 0 : i32
    %c0_i32_1 = arith.constant 0 : i32
    return %arg0, %c0_i32, %c0_i32_0 : i32, i32, i32
  }
}

module attributes {stable_mosaic.version = 11 : i64} {
  func.func @_bnrelu_conv_stats_kernel(%arg0: i32, %arg1: memref<128x64xf32, #tpu.memory_space<vmem>>, %arg2: memref<1x1x64xf32, #tpu.memory_space<vmem>>, %arg3: memref<1x1x64xf32, #tpu.memory_space<vmem>>, %arg4: memref<1x64xf32, #tpu.memory_space<vmem>>, %arg5: memref<1x64xf32, #tpu.memory_space<vmem>>, %arg6: memref<64x32xbf16, #tpu.memory_space<vmem>>, %arg7: memref<1x32xf32, #tpu.memory_space<vmem>>, %arg8: memref<128x32xf32, #tpu.memory_space<vmem>>, %arg9: memref<1x1x32xf32, #tpu.memory_space<vmem>>, %arg10: memref<1x1x32xf32, #tpu.memory_space<vmem>>) attributes {dimension_semantics = [#tpu.dimension_semantics<parallel>], iteration_bounds = array<i64: 1>, scalar_prefetch = 0 : i64, scratch_operands = 0 : i64, tpu.core_type = #tpu.core_type<tc>, window_params = [{transform_indices = @transform_0, window_bounds = array<i64: 128, 64>}, {pipeline_mode = #tpu.pipeline_mode<synchronous>, transform_indices = @transform_1, window_bounds = array<i64: 1, 1, 64>}, {pipeline_mode = #tpu.pipeline_mode<synchronous>, transform_indices = @transform_2, window_bounds = array<i64: 1, 1, 64>}, {pipeline_mode = #tpu.pipeline_mode<synchronous>, transform_indices = @transform_3, window_bounds = array<i64: 1, 64>}, {pipeline_mode = #tpu.pipeline_mode<synchronous>, transform_indices = @transform_4, window_bounds = array<i64: 1, 64>}, {pipeline_mode = #tpu.pipeline_mode<synchronous>, transform_indices = @transform_5, window_bounds = array<i64: 64, 32>}, {pipeline_mode = #tpu.pipeline_mode<synchronous>, transform_indices = @transform_6, window_bounds = array<i64: 1, 32>}, {transform_indices = @transform_7, window_bounds = array<i64: 128, 32>}, {transform_indices = @transform_8, window_bounds = array<i64: 1, 1, 32>}, {transform_indices = @transform_9, window_bounds = array<i64: 1, 1, 32>}]} {
    %c0 = arith.constant 0 : index
    %c0_0 = arith.constant 0 : index
    %c0_1 = arith.constant 0 : index
    %0 = vector.load %arg2[%c0, %c0_0, %c0_1] : memref<1x1x64xf32, #tpu.memory_space<vmem>>, vector<1x1x64xf32>
    %cst = arith.constant dense<0.000000e+00> : vector<1x64xf32>
    %1 = vector.multi_reduction <add>, %0, %cst [0] : vector<1x1x64xf32> to vector<1x64xf32>
    %cst_2 = arith.constant 7.812500e-03 : f32
    %2 = vector.broadcast %cst_2 : f32 to vector<1x64xf32>
    %3 = arith.mulf %1, %2 : vector<1x64xf32>
    %c0_3 = arith.constant 0 : index
    %c0_4 = arith.constant 0 : index
    %c0_5 = arith.constant 0 : index
    %4 = vector.load %arg3[%c0_3, %c0_4, %c0_5] : memref<1x1x64xf32, #tpu.memory_space<vmem>>, vector<1x1x64xf32>
    %cst_6 = arith.constant dense<0.000000e+00> : vector<1x64xf32>
    %5 = vector.multi_reduction <add>, %4, %cst_6 [0] : vector<1x1x64xf32> to vector<1x64xf32>
    %cst_7 = arith.constant 7.812500e-03 : f32
    %6 = vector.broadcast %cst_7 : f32 to vector<1x64xf32>
    %7 = arith.mulf %5, %6 : vector<1x64xf32>
    %8 = arith.mulf %3, %3 : vector<1x64xf32>
    %9 = arith.subf %7, %8 : vector<1x64xf32>
    %c0_8 = arith.constant 0 : index
    %c0_9 = arith.constant 0 : index
    %10 = vector.load %arg4[%c0_8, %c0_9] : memref<1x64xf32, #tpu.memory_space<vmem>>, vector<1x64xf32>
    %cst_10 = arith.constant 9.99999974E-6 : f32
    %11 = vector.broadcast %cst_10 : f32 to vector<1x64xf32>
    %12 = arith.addf %9, %11 : vector<1x64xf32>
    %13 = math.rsqrt %12 : vector<1x64xf32>
    %14 = arith.mulf %10, %13 : vector<1x64xf32>
    %c0_11 = arith.constant 0 : index
    %c0_12 = arith.constant 0 : index
    %15 = vector.load %arg5[%c0_11, %c0_12] : memref<1x64xf32, #tpu.memory_space<vmem>>, vector<1x64xf32>
    %16 = arith.mulf %3, %14 : vector<1x64xf32>
    %17 = arith.subf %15, %16 : vector<1x64xf32>
    %c0_13 = arith.constant 0 : index
    %c0_14 = arith.constant 0 : index
    %18 = vector.load %arg1[%c0_13, %c0_14] : memref<128x64xf32, #tpu.memory_space<vmem>>, vector<128x64xf32>
    %19 = vector.broadcast %14 : vector<1x64xf32> to vector<128x64xf32>
    %20 = arith.mulf %18, %19 : vector<128x64xf32>
    %21 = vector.broadcast %17 : vector<1x64xf32> to vector<128x64xf32>
    %22 = arith.addf %20, %21 : vector<128x64xf32>
    %cst_15 = arith.constant 0.000000e+00 : f32
    %23 = vector.broadcast %cst_15 : f32 to vector<128x64xf32>
    %24 = arith.maximumf %22, %23 : vector<128x64xf32>
    %25 = arith.truncf %24 : vector<128x64xf32> to vector<128x64xbf16>
    %c0_16 = arith.constant 0 : index
    %c0_17 = arith.constant 0 : index
    %26 = vector.load %arg6[%c0_16, %c0_17] : memref<64x32xbf16, #tpu.memory_space<vmem>>, vector<64x32xbf16>
    %cst_18 = arith.constant dense<0.000000e+00> : vector<128x32xf32>
    %27 = tpu.matmul %25, %26, %cst_18 {dimension_numbers = #tpu.dot_dimension_numbers<[1], [0], [0], [1], [0, 0, 1, 1], [], []>} : vector<128x64xbf16>, vector<64x32xbf16>, vector<128x32xf32> -> vector<128x32xf32>
    %c0_19 = arith.constant 0 : index
    %c0_20 = arith.constant 0 : index
    %28 = vector.load %arg7[%c0_19, %c0_20] : memref<1x32xf32, #tpu.memory_space<vmem>>, vector<1x32xf32>
    %29 = vector.broadcast %28 : vector<1x32xf32> to vector<128x32xf32>
    %30 = arith.addf %27, %29 : vector<128x32xf32>
    %c0_21 = arith.constant 0 : index
    %c0_22 = arith.constant 0 : index
    %31 = vector.load %arg8[%c0_21, %c0_22] : memref<128x32xf32, #tpu.memory_space<vmem>>, vector<128x32xf32>
    tpu.vector_store %arg8[%c0_21, %c0_22], %30 {strides = array<i32>} : memref<128x32xf32, #tpu.memory_space<vmem>>, vector<128x32xf32>,
    %c128_i32 = arith.constant 128 : i32
    %32 = arith.muli %arg0, %c128_i32 : i32
    %33 = tpu.iota {dimensions = array<i32: 0>} : vector<128x1xi32>
    %34 = vector.broadcast %32 : i32 to vector<128x1xi32>
    %35 = arith.addi %34, %33 : vector<128x1xi32>
    %c128_i32_23 = arith.constant 128 : i32
    %36 = vector.broadcast %c128_i32_23 : i32 to vector<128x1xi32>
    %37 = arith.cmpi slt, %35, %36 : vector<128x1xi32>
    %38 = arith.extui %37 : vector<128x1xi1> to vector<128x1xi32>
    %39 = arith.sitofp %38 : vector<128x1xi32> to vector<128x1xf32>
    %40 = vector.broadcast %39 : vector<128x1xf32> to vector<128x32xf32>
    %41 = arith.mulf %30, %40 : vector<128x32xf32>
    %cst_24 = arith.constant dense<0.000000e+00> : vector<32xf32>
    %42 = vector.multi_reduction <add>, %41, %cst_24 [0] : vector<128x32xf32> to vector<32xf32>
    %43 = vector.shape_cast %42 : vector<32xf32> to vector<1x32xf32>
    %44 = vector.shape_cast %43 : vector<1x32xf32> to vector<1x1x32xf32>
    %c0_25 = arith.constant 0 : index
    %c0_26 = arith.constant 0 : index
    %c0_27 = arith.constant 0 : index
    %45 = vector.load %arg9[%c0_25, %c0_26, %c0_27] : memref<1x1x32xf32, #tpu.memory_space<vmem>>, vector<1x1x32xf32>
    tpu.vector_store %arg9[%c0_25, %c0_26, %c0_27], %44 {strides = array<i32>} : memref<1x1x32xf32, #tpu.memory_space<vmem>>, vector<1x1x32xf32>,
    %46 = arith.mulf %41, %41 : vector<128x32xf32>
    %cst_28 = arith.constant dense<0.000000e+00> : vector<32xf32>
    %47 = vector.multi_reduction <add>, %46, %cst_28 [0] : vector<128x32xf32> to vector<32xf32>
    %48 = vector.shape_cast %47 : vector<32xf32> to vector<1x32xf32>
    %49 = vector.shape_cast %48 : vector<1x32xf32> to vector<1x1x32xf32>
    %c0_29 = arith.constant 0 : index
    %c0_30 = arith.constant 0 : index
    %c0_31 = arith.constant 0 : index
    %50 = vector.load %arg10[%c0_29, %c0_30, %c0_31] : memref<1x1x32xf32, #tpu.memory_space<vmem>>, vector<1x1x32xf32>
    tpu.vector_store %arg10[%c0_29, %c0_30, %c0_31], %49 {strides = array<i32>} : memref<1x1x32xf32, #tpu.memory_space<vmem>>, vector<1x1x32xf32>,
    return
  }
  func.func @transform_0(%arg0: i32) -> (i32, i32) {
    %c0_i32 = arith.constant 0 : i32
    %c0_i32_0 = arith.constant 0 : i32
    return %arg0, %c0_i32 : i32, i32
  }
  func.func @transform_1(%arg0: i32) -> (i32, i32, i32) {
    %c0_i32 = arith.constant 0 : i32
    %c0_i32_0 = arith.constant 0 : i32
    %c0_i32_1 = arith.constant 0 : i32
    %c0_i32_2 = arith.constant 0 : i32
    return %c0_i32, %c0_i32_0, %c0_i32_1 : i32, i32, i32
  }
  func.func @transform_2(%arg0: i32) -> (i32, i32, i32) {
    %c0_i32 = arith.constant 0 : i32
    %c0_i32_0 = arith.constant 0 : i32
    %c0_i32_1 = arith.constant 0 : i32
    %c0_i32_2 = arith.constant 0 : i32
    return %c0_i32, %c0_i32_0, %c0_i32_1 : i32, i32, i32
  }
  func.func @transform_3(%arg0: i32) -> (i32, i32) {
    %c0_i32 = arith.constant 0 : i32
    %c0_i32_0 = arith.constant 0 : i32
    %c0_i32_1 = arith.constant 0 : i32
    return %c0_i32, %c0_i32_0 : i32, i32
  }
  func.func @transform_4(%arg0: i32) -> (i32, i32) {
    %c0_i32 = arith.constant 0 : i32
    %c0_i32_0 = arith.constant 0 : i32
    %c0_i32_1 = arith.constant 0 : i32
    return %c0_i32, %c0_i32_0 : i32, i32
  }
  func.func @transform_5(%arg0: i32) -> (i32, i32) {
    %c0_i32 = arith.constant 0 : i32
    %c0_i32_0 = arith.constant 0 : i32
    %c0_i32_1 = arith.constant 0 : i32
    return %c0_i32, %c0_i32_0 : i32, i32
  }
  func.func @transform_6(%arg0: i32) -> (i32, i32) {
    %c0_i32 = arith.constant 0 : i32
    %c0_i32_0 = arith.constant 0 : i32
    %c0_i32_1 = arith.constant 0 : i32
    return %c0_i32, %c0_i32_0 : i32, i32
  }
  func.func @transform_7(%arg0: i32) -> (i32, i32) {
    %c0_i32 = arith.constant 0 : i32
    %c0_i32_0 = arith.constant 0 : i32
    return %arg0, %c0_i32 : i32, i32
  }
  func.func @transform_8(%arg0: i32) -> (i32, i32, i32) {
    %c0_i32 = arith.constant 0 : i32
    %c0_i32_0 = arith.constant 0 : i32
    %c0_i32_1 = arith.constant 0 : i32
    return %arg0, %c0_i32, %c0_i32_0 : i32, i32, i32
  }
  func.func @transform_9(%arg0: i32) -> (i32, i32, i32) {
    %c0_i32 = arith.constant 0 : i32
    %c0_i32_0 = arith.constant 0 : i32
    %c0_i32_1 = arith.constant 0 : i32
    return %arg0, %c0_i32, %c0_i32_0 : i32, i32, i32
  }
}

module attributes {stable_mosaic.version = 11 : i64} {
  func.func @_bn_relu_kernel(%arg0: i32, %arg1: memref<128x32xf32, #tpu.memory_space<vmem>>, %arg2: memref<1x1x32xf32, #tpu.memory_space<vmem>>, %arg3: memref<1x1x32xf32, #tpu.memory_space<vmem>>, %arg4: memref<1x32xf32, #tpu.memory_space<vmem>>, %arg5: memref<1x32xf32, #tpu.memory_space<vmem>>, %arg6: memref<128x32xf32, #tpu.memory_space<vmem>>) attributes {dimension_semantics = [#tpu.dimension_semantics<parallel>], iteration_bounds = array<i64: 1>, scalar_prefetch = 0 : i64, scratch_operands = 0 : i64, tpu.core_type = #tpu.core_type<tc>, window_params = [{transform_indices = @transform_0, window_bounds = array<i64: 128, 32>}, {pipeline_mode = #tpu.pipeline_mode<synchronous>, transform_indices = @transform_1, window_bounds = array<i64: 1, 1, 32>}, {pipeline_mode = #tpu.pipeline_mode<synchronous>, transform_indices = @transform_2, window_bounds = array<i64: 1, 1, 32>}, {pipeline_mode = #tpu.pipeline_mode<synchronous>, transform_indices = @transform_3, window_bounds = array<i64: 1, 32>}, {pipeline_mode = #tpu.pipeline_mode<synchronous>, transform_indices = @transform_4, window_bounds = array<i64: 1, 32>}, {transform_indices = @transform_5, window_bounds = array<i64: 128, 32>}]} {
    %c0 = arith.constant 0 : index
    %c0_0 = arith.constant 0 : index
    %c0_1 = arith.constant 0 : index
    %0 = vector.load %arg2[%c0, %c0_0, %c0_1] : memref<1x1x32xf32, #tpu.memory_space<vmem>>, vector<1x1x32xf32>
    %cst = arith.constant dense<0.000000e+00> : vector<1x32xf32>
    %1 = vector.multi_reduction <add>, %0, %cst [0] : vector<1x1x32xf32> to vector<1x32xf32>
    %cst_2 = arith.constant 7.812500e-03 : f32
    %2 = vector.broadcast %cst_2 : f32 to vector<1x32xf32>
    %3 = arith.mulf %1, %2 : vector<1x32xf32>
    %c0_3 = arith.constant 0 : index
    %c0_4 = arith.constant 0 : index
    %c0_5 = arith.constant 0 : index
    %4 = vector.load %arg3[%c0_3, %c0_4, %c0_5] : memref<1x1x32xf32, #tpu.memory_space<vmem>>, vector<1x1x32xf32>
    %cst_6 = arith.constant dense<0.000000e+00> : vector<1x32xf32>
    %5 = vector.multi_reduction <add>, %4, %cst_6 [0] : vector<1x1x32xf32> to vector<1x32xf32>
    %cst_7 = arith.constant 7.812500e-03 : f32
    %6 = vector.broadcast %cst_7 : f32 to vector<1x32xf32>
    %7 = arith.mulf %5, %6 : vector<1x32xf32>
    %8 = arith.mulf %3, %3 : vector<1x32xf32>
    %9 = arith.subf %7, %8 : vector<1x32xf32>
    %c0_8 = arith.constant 0 : index
    %c0_9 = arith.constant 0 : index
    %10 = vector.load %arg4[%c0_8, %c0_9] : memref<1x32xf32, #tpu.memory_space<vmem>>, vector<1x32xf32>
    %cst_10 = arith.constant 9.99999974E-6 : f32
    %11 = vector.broadcast %cst_10 : f32 to vector<1x32xf32>
    %12 = arith.addf %9, %11 : vector<1x32xf32>
    %13 = math.rsqrt %12 : vector<1x32xf32>
    %14 = arith.mulf %10, %13 : vector<1x32xf32>
    %c0_11 = arith.constant 0 : index
    %c0_12 = arith.constant 0 : index
    %15 = vector.load %arg5[%c0_11, %c0_12] : memref<1x32xf32, #tpu.memory_space<vmem>>, vector<1x32xf32>
    %16 = arith.mulf %3, %14 : vector<1x32xf32>
    %17 = arith.subf %15, %16 : vector<1x32xf32>
    %c0_13 = arith.constant 0 : index
    %c0_14 = arith.constant 0 : index
    %18 = vector.load %arg1[%c0_13, %c0_14] : memref<128x32xf32, #tpu.memory_space<vmem>>, vector<128x32xf32>
    %19 = vector.broadcast %14 : vector<1x32xf32> to vector<128x32xf32>
    %20 = arith.mulf %18, %19 : vector<128x32xf32>
    %21 = vector.broadcast %17 : vector<1x32xf32> to vector<128x32xf32>
    %22 = arith.addf %20, %21 : vector<128x32xf32>
    %cst_15 = arith.constant 0.000000e+00 : f32
    %23 = vector.broadcast %cst_15 : f32 to vector<128x32xf32>
    %24 = arith.maximumf %22, %23 : vector<128x32xf32>
    %c0_16 = arith.constant 0 : index
    %c0_17 = arith.constant 0 : index
    %25 = vector.load %arg6[%c0_16, %c0_17] : memref<128x32xf32, #tpu.memory_space<vmem>>, vector<128x32xf32>
    tpu.vector_store %arg6[%c0_16, %c0_17], %24 {strides = array<i32>} : memref<128x32xf32, #tpu.memory_space<vmem>>, vector<128x32xf32>,
    return
  }
  func.func @transform_0(%arg0: i32) -> (i32, i32) {
    %c0_i32 = arith.constant 0 : i32
    %c0_i32_0 = arith.constant 0 : i32
    return %arg0, %c0_i32 : i32, i32
  }
  func.func @transform_1(%arg0: i32) -> (i32, i32, i32) {
    %c0_i32 = arith.constant 0 : i32
    %c0_i32_0 = arith.constant 0 : i32
    %c0_i32_1 = arith.constant 0 : i32
    %c0_i32_2 = arith.constant 0 : i32
    return %c0_i32, %c0_i32_0, %c0_i32_1 : i32, i32, i32
  }
  func.func @transform_2(%arg0: i32) -> (i32, i32, i32) {
    %c0_i32 = arith.constant 0 : i32
    %c0_i32_0 = arith.constant 0 : i32
    %c0_i32_1 = arith.constant 0 : i32
    %c0_i32_2 = arith.constant 0 : i32
    return %c0_i32, %c0_i32_0, %c0_i32_1 : i32, i32, i32
  }
  func.func @transform_3(%arg0: i32) -> (i32, i32) {
    %c0_i32 = arith.constant 0 : i32
    %c0_i32_0 = arith.constant 0 : i32
    %c0_i32_1 = arith.constant 0 : i32
    return %c0_i32, %c0_i32_0 : i32, i32
  }
  func.func @transform_4(%arg0: i32) -> (i32, i32) {
    %c0_i32 = arith.constant 0 : i32
    %c0_i32_0 = arith.constant 0 : i32
    %c0_i32_1 = arith.constant 0 : i32
    return %c0_i32, %c0_i32_0 : i32, i32
  }
  func.func @transform_5(%arg0: i32) -> (i32, i32) {
    %c0_i32 = arith.constant 0 : i32
    %c0_i32_0 = arith.constant 0 : i32
    return %arg0, %c0_i32 : i32, i32
  }
}

</mosaic_0001>

<llo_original>
// kernel: _lambda_.8
$region0: #{_lambda_.8}
  #allocation0 [shape = 'u32[]', space=smem, size = 0x4, offset = 0x4, fixed_abs, tag = 'smem constant byte address 0x4 - core index']
  #allocation1 [shape = 'u32[72,128]{1,0:T(1,128)}', space=vmem, size = 0x9000, scoped, tag = 'internal scratch']
  %s0 = inlined_call_operand.vmem [shape: f32[128,64], index: 0, kind: input, shape index: {}]
  %s1 = inlined_call_operand.vmem [shape: f32[1,1,64], index: 1, kind: input, shape index: {}]
  %s2 = inlined_call_operand.vmem [shape: f32[1,1,64], index: 2, kind: input, shape index: {}]
  %s3 = inlined_call_operand.vmem [shape: f32[1,64], index: 3, kind: input, shape index: {}]
  %s4 = inlined_call_operand.vmem [shape: f32[1,64], index: 4, kind: input, shape index: {}]
  %s5 = inlined_call_operand.vmem [shape: f32[128,64], index: 5, kind: output, shape index: {}]
  %s6 = sld [smem:[#allocation0]]
  $region30: #{_lambda_.8} parent=0
    _
  %s8 = ssub.s32 1, %s6
  %s9 = scalar_select 0, %s8, %s6
  // Predicated region
  $region2: #{_lambda_.8} parent=0 // pred_check
    _
  $region3: #{_lambda_.8} parent=0 // pred_check_branch
    %11 = sbr.rel (0) target = $region5
  $region4: #{_lambda_.8} parent=0 // pred_region
    _
  $region5: #{_lambda_.8} parent=0 // pred_fallthru
    _
  // Predicated region
  $region6: #{_lambda_.8} parent=0 // pred_check
    _
  $region7: #{_lambda_.8} parent=0 // pred_check_branch
    %13 = sbr.rel (0) target = $region9
  $region8: #{_lambda_.8} parent=0 // pred_region
    _
  $region9: #{_lambda_.8} parent=0 // pred_fallthru
    _
  // Predicated region
  $region10: #{_lambda_.8} parent=0 // pred_check
    _
  $region11: #{_lambda_.8} parent=0 // pred_check_branch
    %15 = sbr.rel (0) target = $region13
  $region12: #{_lambda_.8} parent=0 // pred_region
    _
  $region13: #{_lambda_.8} parent=0 // pred_fallthru
    _
  // Predicated region
  $region14: #{_lambda_.8} parent=0 // pred_check
    _
  $region15: #{_lambda_.8} parent=0 // pred_check_branch
    %17 = sbr.rel (0) target = $region17
  $region16: #{_lambda_.8} parent=0 // pred_region
    _
  $region17: #{_lambda_.8} parent=0 // pred_fallthru
    _
  // Predicated region
  $region18: #{_lambda_.8} parent=0 // pred_check
    _
  $region19: #{_lambda_.8} parent=0 // pred_check_branch
    %19 = sbr.rel (0) target = $region21
  $region20: #{_lambda_.8} parent=0 // pred_region
    _
  $region21: #{_lambda_.8} parent=0 // pred_fallthru
    _
  %v20 = vld [vmem:[%s1] sm:$0x1]
  %v21 = vadd.f32 %v20, 0.0
  %v22 = vmul.f32 %v21, 0.0078125
  %v23 = vld [vmem:[%s2] sm:$0x1]
  %v24 = vadd.f32 %v23, 0.0
  %v25 = vmul.f32 %v24, 0.0078125
  %v26 = vmul.f32 %v22, %v22
  %v27 = vsub.f32 %v25, %v26
  %v28 = vld [vmem:[%s3] sm:$0x1]
  %v29 = vadd.f32 %v27, 1e-05
  %v30 = vrsqrt.pop %v29
  %v31 = vmul.f32 %v30, %v29
  %v32 = vmul.f32 %v31, %v30
  %v33 = vmul.f32 0.5, %v32
  %v34 = vsub.f32 1.5, %v33
  %v35 = vmul.f32 %v30, %v34
  %vm36 = vweird.f32 %v29
  %vm37 = vweird.f32 %v30
  %vm38 = vmor %vm36, %vm37
  %v39 = vsel %vm38, %v30, %v35
  %v40 = vmul.f32 %v28, %v39
  %v41 = vld [vmem:[%s4] sm:$0x1]
  %v42 = vmul.f32 %v22, %v40
  %v43 = vsub.f32 %v41, %v42
  %v44 = vld [vmem:[%s0] sm:$0xff]
  %v45 = vld [vmem:[%s0 + $0x8] sm:$0xff]
  %v46 = vld [vmem:[%s0 + $0x10] sm:$0xff]
  %v47 = vld [vmem:[%s0 + $0x18] sm:$0xff]
  %v48 = vld [vmem:[%s0 + $0x20] sm:$0xff]
  %v49 = vld [vmem:[%s0 + $0x28] sm:$0xff]
  %v50 = vld [vmem:[%s0 + $0x30] sm:$0xff]
  %v51 = vld [vmem:[%s0 + $0x38] sm:$0xff]
  %v52 = vld [vmem:[%s0 + $0x40] sm:$0xff]
  %v53 = vld [vmem:[%s0 + $0x48] sm:$0xff]
  %v54 = vld [vmem:[%s0 + $0x50] sm:$0xff]
  %v55 = vld [vmem:[%s0 + $0x58] sm:$0xff]
  %v56 = vld [vmem:[%s0 + $0x60] sm:$0xff]
  %v57 = vld [vmem:[%s0 + $0x68] sm:$0xff]
  %v58 = vld [vmem:[%s0 + $0x70] sm:$0xff]
  %v59 = vld [vmem:[%s0 + $0x78] sm:$0xff]
  %v61 = vperm.slane %v40, 0
  %v63 = vmul.f32 %v44, %v61
  %v64 = vmul.f32 %v45, %v61
  %v65 = vmul.f32 %v46, %v61
  %v66 = vmul.f32 %v47, %v61
  %v67 = vmul.f32 %v48, %v61
  %v68 = vmul.f32 %v49, %v61
  %v69 = vmul.f32 %v50, %v61
  %v70 = vmul.f32 %v51, %v61
  %v71 = vmul.f32 %v52, %v61
  %v72 = vmul.f32 %v53, %v61
  %v73 = vmul.f32 %v54, %v61
  %v74 = vmul.f32 %v55, %v61
  %v75 = vmul.f32 %v56, %v61
  %v76 = vmul.f32 %v57, %v61
  %v77 = vmul.f32 %v58, %v61
  %v78 = vmul.f32 %v59, %v61
  %v80 = vperm.slane %v43, 0
  %v82 = vadd.f32 %v63, %v80
  %v83 = vadd.f32 %v64, %v80
  %v84 = vadd.f32 %v65, %v80
  %v85 = vadd.f32 %v66, %v80
  %v86 = vadd.f32 %v67, %v80
  %v87 = vadd.f32 %v68, %v80
  %v88 = vadd.f32 %v69, %v80
  %v89 = vadd.f32 %v70, %v80
  %v90 = vadd.f32 %v71, %v80
  %v91 = vadd.f32 %v72, %v80
  %v92 = vadd.f32 %v73, %v80
  %v93 = vadd.f32 %v74, %v80
  %v94 = vadd.f32 %v75, %v80
  %v95 = vadd.f32 %v76, %v80
  %v96 = vadd.f32 %v77, %v80
  %v97 = vadd.f32 %v78, %v80
  %v98 = vmax.f32 %v82, 0.0
  %v99 = vmax.f32 %v83, 0.0
  %v100 = vmax.f32 %v84, 0.0
  %v101 = vmax.f32 %v85, 0.0
  %v102 = vmax.f32 %v86, 0.0
  %v103 = vmax.f32 %v87, 0.0
  %v104 = vmax.f32 %v88, 0.0
  %v105 = vmax.f32 %v89, 0.0
  %v106 = vmax.f32 %v90, 0.0
  %v107 = vmax.f32 %v91, 0.0
  %v108 = vmax.f32 %v92, 0.0
  %v109 = vmax.f32 %v93, 0.0
  %v110 = vmax.f32 %v94, 0.0
  %v111 = vmax.f32 %v95, 0.0
  %v112 = vmax.f32 %v96, 0.0
  %v113 = vmax.f32 %v97, 0.0
  %vm114 = vcmask 523264
  %115 = vst.msk [vmem:[%s5] sm:$0xff] %vm114, %v98
  %116 = vst.msk [vmem:[%s5 + $0x8] sm:$0xff] %vm114, %v99
  %117 = vst.msk [vmem:[%s5 + $0x10] sm:$0xff] %vm114, %v100
  %118 = vst.msk [vmem:[%s5 + $0x18] sm:$0xff] %vm114, %v101
  %119 = vst.msk [vmem:[%s5 + $0x20] sm:$0xff] %vm114, %v102
  %120 = vst.msk [vmem:[%s5 + $0x28] sm:$0xff] %vm114, %v103
  %121 = vst.msk [vmem:[%s5 + $0x30] sm:$0xff] %vm114, %v104
  %122 = vst.msk [vmem:[%s5 + $0x38] sm:$0xff] %vm114, %v105
  %123 = vst.msk [vmem:[%s5 + $0x40] sm:$0xff] %vm114, %v106
  %124 = vst.msk [vmem:[%s5 + $0x48] sm:$0xff] %vm114, %v107
  %125 = vst.msk [vmem:[%s5 + $0x50] sm:$0xff] %vm114, %v108
  %126 = vst.msk [vmem:[%s5 + $0x58] sm:$0xff] %vm114, %v109
  %127 = vst.msk [vmem:[%s5 + $0x60] sm:$0xff] %vm114, %v110
  %128 = vst.msk [vmem:[%s5 + $0x68] sm:$0xff] %vm114, %v111
  %129 = vst.msk [vmem:[%s5 + $0x70] sm:$0xff] %vm114, %v112
  %130 = vst.msk [vmem:[%s5 + $0x78] sm:$0xff] %vm114, %v113
  // Predicated region
  $region22: #{_lambda_.8} parent=0 // pred_check
    _
  $region23: #{_lambda_.8} parent=0 // pred_check_branch
    %132 = sbr.rel (0) target = $region25
  $region24: #{_lambda_.8} parent=0 // pred_region
    _
  $region25: #{_lambda_.8} parent=0 // pred_fallthru
    _
  // Predicated region
  $region26: #{_lambda_.8} parent=0 // pred_check
    _
  $region27: #{_lambda_.8} parent=0 // pred_check_branch
    %134 = sbr.rel (0) target = $region29
  $region28: #{_lambda_.8} parent=0 // pred_region
    _
  $region29: #{_lambda_.8} parent=0 // pred_fallthru
    _

// kernel: _lambda_.7
$region0: #{_lambda_.7}
  #allocation0 [shape = 'u32[]', space=smem, size = 0x4, offset = 0x4, fixed_abs, tag = 'smem constant byte address 0x4 - core index']
  #allocation1 [shape = 'u32[72,128]{1,0:T(1,128)}', space=vmem, size = 0x9000, scoped, tag = 'internal scratch']
  %s0 = inlined_call_operand.vmem [shape: bf16[128,36], index: 0, kind: input, shape index: {}]
  %s1 = inlined_call_operand.vmem [shape: bf16[36,64], index: 1, kind: input, shape index: {}]
  %s2 = inlined_call_operand.vmem [shape: f32[1,64], index: 2, kind: input, shape index: {}]
  %s3 = inlined_call_operand.vmem [shape: f32[128,64], index: 3, kind: output, shape index: {0}]
  %s4 = inlined_call_operand.vmem [shape: f32[1,1,64], index: 4, kind: output, shape index: {1}]
  %s5 = inlined_call_operand.vmem [shape: f32[1,1,64], index: 5, kind: output, shape index: {2}]
  %6 = xla_tuple %s3, %s4, %s5
  %s7 = sld [smem:[#allocation0]]
  $region38: #{_lambda_.7} parent=0
    _
  %s9 = ssub.s32 1, %s7
  %s10 = scalar_select 0, %s9, %s7
  // Predicated region
  $region2: #{_lambda_.7} parent=0 // pred_check
    _
  $region3: #{_lambda_.7} parent=0 // pred_check_branch
    %12 = sbr.rel (0) target = $region5
  $region4: #{_lambda_.7} parent=0 // pred_region
    _
  $region5: #{_lambda_.7} parent=0 // pred_fallthru
    _
  // Predicated region
  $region6: #{_lambda_.7} parent=0 // pred_check
    _
  $region7: #{_lambda_.7} parent=0 // pred_check_branch
    %14 = sbr.rel (0) target = $region9
  $region8: #{_lambda_.7} parent=0 // pred_region
    _
  $region9: #{_lambda_.7} parent=0 // pred_fallthru
    _
  // Predicated region
  $region10: #{_lambda_.7} parent=0 // pred_check
    _
  $region11: #{_lambda_.7} parent=0 // pred_check_branch
    %16 = sbr.rel (0) target = $region13
  $region12: #{_lambda_.7} parent=0 // pred_region
    _
  $region13: #{_lambda_.7} parent=0 // pred_fallthru
    _
  %v18 = vld [vmem:[%s0] sm:$0xf]
  %v19 = vld [vmem:[%s0 + $0x4] sm:$0xf]
  %v20 = vld [vmem:[%s0 + $0x8] sm:$0xf]
  %v21 = vld [vmem:[%s0 + $0xc] sm:$0xf]
  %v22 = vld [vmem:[%s0 + $0x10] sm:$0xf]
  %v23 = vld [vmem:[%s0 + $0x14] sm:$0xf]
  %v24 = vld [vmem:[%s0 + $0x18] sm:$0xf]
  %v25 = vld [vmem:[%s0 + $0x1c] sm:$0xf]
  %v26 = vld [vmem:[%s0 + $0x20] sm:$0xf]
  %v27 = vld [vmem:[%s0 + $0x24] sm:$0xf]
  %v28 = vld [vmem:[%s0 + $0x28] sm:$0xf]
  %v29 = vld [vmem:[%s0 + $0x2c] sm:$0xf]
  %v30 = vld [vmem:[%s0 + $0x30] sm:$0xf]
  %v31 = vld [vmem:[%s0 + $0x34] sm:$0xf]
  %v32 = vld [vmem:[%s0 + $0x38] sm:$0xf]
  %v33 = vld [vmem:[%s0 + $0x3c] sm:$0xf]
  %v34 = vld [vmem:[%s1] sm:$0xf]
  %v35 = vld [vmem:[%s1 + $0x4] sm:$0xf]
  %v36 = vld [vmem:[%s1 + $0x8] sm:$0xf]
  %v37 = vld [vmem:[%s1 + $0xc] sm:$0xf]
  %v38 = vld [vmem:[%s1 + $0x10] sm:$0x3]
  %v39 = vld [vmem:[%s2] sm:$0x1]
  %v41 = vperm.slane %v39, 0
  %v59 = vunpack.c.l.b16 %v18
  %v60 = vunpack.c.l.b16 %v19
  %v61 = vunpack.c.l.b16 %v20
  %v62 = vunpack.c.l.b16 %v21
  %v63 = vunpack.c.l.b16 %v22
  %v64 = vunpack.c.l.b16 %v23
  %v65 = vunpack.c.l.b16 %v24
  %v66 = vunpack.c.l.b16 %v25
  %v67 = vunpack.c.l.b16 %v26
  %v68 = vunpack.c.l.b16 %v27
  %v69 = vunpack.c.l.b16 %v28
  %v70 = vunpack.c.l.b16 %v29
  %v71 = vunpack.c.l.b16 %v30
  %v72 = vunpack.c.l.b16 %v31
  %v73 = vunpack.c.l.b16 %v32
  %v74 = vunpack.c.l.b16 %v33
  %v75 = vpack.c.b16 %v60, %v59
  %v76 = vpack.c.b16 %v62, %v61
  %v77 = vpack.c.b16 %v64, %v63
  %v78 = vpack.c.b16 %v66, %v65
  %v79 = vpack.c.b16 %v68, %v67
  %v80 = vpack.c.b16 %v70, %v69
  %v81 = vpack.c.b16 %v72, %v71
  %v82 = vpack.c.b16 %v74, %v73
  %v88 = vunpack.c.l.b16 %v34
  %v89 = vunpack.c.l.b16 %v35
  %v90 = vunpack.c.l.b16 %v36
  %v91 = vunpack.c.l.b16 %v37
  %v92 = vunpack.c.l.b16 %v38
  %v93 = vpack.c.b16 %v89, %v88
  %v94 = vpack.c.b16 %v91, %v90
  %v95 = vpack.c.b16 %v92, %v92
  %vm98 = vcmask 293888
  %v100 = vsel %vm98, %v75, 0
  %v103 = vsel %vm98, %v76, 0
  %v106 = vsel %vm98, %v77, 0
  %v109 = vsel %vm98, %v78, 0
  %v112 = vsel %vm98, %v79, 0
  %v115 = vsel %vm98, %v80, 0
  %v118 = vsel %vm98, %v81, 0
  %v121 = vsel %vm98, %v82, 0
  %vm123 = vcmask 1041408
  %v125 = vsel %vm123, %v95, 0
  %127 = vmatpush.bf16.msra.mxu0 0
  %128 = vmatpush.bf16.msra.mxu0 0
  %129 = vmatpush.bf16.msra.mxu0 0
  %130 = vmatpush.bf16.msra.mxu0 0
  %131 = vmatpush.bf16.msra.mxu0 0
  %132 = vmatpush.bf16.msra.mxu0 %v125
  %133 = vmatpush.bf16.msra.mxu0 %v94
  %134 = vmatpush.bf16.msra.mxu0 %v93
  %135 = vmatmul.bf16.gmra.mxu0 %v100
  %v136 = vpop.f32.mrf.mxu0
  %v137 = vadd.f32 %v41, %v136
  %v138 = vpop.f32.mrf.mxu0
  %v139 = vadd.f32 %v41, %v138
  %140 = vmatmul.bf16.gmra.mxu0 %v103
  %v141 = vpop.f32.mrf.mxu0
  %v142 = vadd.f32 %v41, %v141
  %v143 = vpop.f32.mrf.mxu0
  %v144 = vadd.f32 %v41, %v143
  %145 = vmatmul.bf16.gmra.mxu0 %v106
  %v146 = vpop.f32.mrf.mxu0
  %v147 = vadd.f32 %v41, %v146
  %v148 = vpop.f32.mrf.mxu0
  %v149 = vadd.f32 %v41, %v148
  %150 = vmatmul.bf16.gmra.mxu0 %v109
  %v151 = vpop.f32.mrf.mxu0
  %v152 = vadd.f32 %v41, %v151
  %v153 = vpop.f32.mrf.mxu0
  %v154 = vadd.f32 %v41, %v153
  %155 = vmatmul.bf16.gmra.mxu0 %v112
  %v156 = vpop.f32.mrf.mxu0
  %v157 = vadd.f32 %v41, %v156
  %v158 = vpop.f32.mrf.mxu0
  %v159 = vadd.f32 %v41, %v158
  %160 = vmatmul.bf16.gmra.mxu0 %v115
  %v161 = vpop.f32.mrf.mxu0
  %v162 = vadd.f32 %v41, %v161
  %v163 = vpop.f32.mrf.mxu0
  %v164 = vadd.f32 %v41, %v163
  %165 = vmatmul.bf16.gmra.mxu0 %v118
  %v166 = vpop.f32.mrf.mxu0
  %v167 = vadd.f32 %v41, %v166
  %v168 = vpop.f32.mrf.mxu0
  %v169 = vadd.f32 %v41, %v168
  %170 = vmatmul.bf16.gmra.mxu0 %v121
  %v171 = vpop.f32.mrf.mxu0
  %v172 = vadd.f32 %v41, %v171
  %v173 = vpop.f32.mrf.mxu0
  %v174 = vadd.f32 %v41, %v173
  %175 = vdwg.mxu0
  %vm176 = vcmask 523264
  %177 = vst.msk [vmem:[%s3] sm:$0xff] %vm176, %v137
  %178 = vst.msk [vmem:[%s3 + $0x8] sm:$0xff] %vm176, %v139
  %179 = vst.msk [vmem:[%s3 + $0x10] sm:$0xff] %vm176, %v142
  %180 = vst.msk [vmem:[%s3 + $0x18] sm:$0xff] %vm176, %v144
  %181 = vst.msk [vmem:[%s3 + $0x20] sm:$0xff] %vm176, %v147
  %182 = vst.msk [vmem:[%s3 + $0x28] sm:$0xff] %vm176, %v149
  %183 = vst.msk [vmem:[%s3 + $0x30] sm:$0xff] %vm176, %v152
  %184 = vst.msk [vmem:[%s3 + $0x38] sm:$0xff] %vm176, %v154
  %185 = vst.msk [vmem:[%s3 + $0x40] sm:$0xff] %vm176, %v157
  %186 = vst.msk [vmem:[%s3 + $0x48] sm:$0xff] %vm176, %v159
  %187 = vst.msk [vmem:[%s3 + $0x50] sm:$0xff] %vm176, %v162
  %188 = vst.msk [vmem:[%s3 + $0x58] sm:$0xff] %vm176, %v164
  %189 = vst.msk [vmem:[%s3 + $0x60] sm:$0xff] %vm176, %v167
  %190 = vst.msk [vmem:[%s3 + $0x68] sm:$0xff] %vm176, %v169
  %191 = vst.msk [vmem:[%s3 + $0x70] sm:$0xff] %vm176, %v172
  %192 = vst.msk [vmem:[%s3 + $0x78] sm:$0xff] %vm176, %v174
  %s193 = smul.u32 0, 128
  %v194 = vlaneseq
  %v195 = vshrl.u32 %v194, 7
  %v196 = vadd.s32 %v195, 8
  %v197 = vadd.s32 %v195, 16
  %v198 = vadd.s32 %v195, 24
  %v199 = vadd.s32 %v195, 32
  %v200 = vadd.s32 %v195, 40
  %v201 = vadd.s32 %v195, 48
  %v202 = vadd.s32 %v195, 56
  %v203 = vadd.s32 %v195, 64
  %v204 = vadd.s32 %v195, 72
  %v205 = vadd.s32 %v195, 80
  %v206 = vadd.s32 %v195, 88
  %v207 = vadd.s32 %v195, 96
  %v208 = vadd.s32 %v195, 104
  %v209 = vadd.s32 %v195, 112
  %v210 = vadd.s32 %v195, 120
  %v211 = vstv %s193
  %v212 = vadd.s32 %v211, %v195
  %v213 = vadd.s32 %v211, %v196
  %v214 = vadd.s32 %v211, %v197
  %v215 = vadd.s32 %v211, %v198
  %v216 = vadd.s32 %v211, %v199
  %v217 = vadd.s32 %v211, %v200
  %v218 = vadd.s32 %v211, %v201
  %v219 = vadd.s32 %v211, %v202
  %v220 = vadd.s32 %v211, %v203
  %v221 = vadd.s32 %v211, %v204
  %v222 = vadd.s32 %v211, %v205
  %v223 = vadd.s32 %v211, %v206
  %v224 = vadd.s32 %v211, %v207
  %v225 = vadd.s32 %v211, %v208
  %v226 = vadd.s32 %v211, %v209
  %v227 = vadd.s32 %v211, %v210
  %vm228 = vcmp.lt.s32.totalorder %v212, 128
  %vm229 = vcmp.lt.s32.totalorder %v213, 128
  %vm230 = vcmp.lt.s32.totalorder %v214, 128
  %vm231 = vcmp.lt.s32.totalorder %v215, 128
  %vm232 = vcmp.lt.s32.totalorder %v216, 128
  %vm233 = vcmp.lt.s32.totalorder %v217, 128
  %vm234 = vcmp.lt.s32.totalorder %v218, 128
  %vm235 = vcmp.lt.s32.totalorder %v219, 128
  %vm236 = vcmp.lt.s32.totalorder %v220, 128
  %vm237 = vcmp.lt.s32.totalorder %v221, 128
  %vm238 = vcmp.lt.s32.totalorder %v222, 128
  %vm239 = vcmp.lt.s32.totalorder %v223, 128
  %vm240 = vcmp.lt.s32.totalorder %v224, 128
  %vm241 = vcmp.lt.s32.totalorder %v225, 128
  %vm242 = vcmp.lt.s32.totalorder %v226, 128
  %vm243 = vcmp.lt.s32.totalorder %v227, 128
  %v244 = vsel %vm228, 1, 0
  %v245 = vsel %vm229, 1, 0
  %v246 = vsel %vm230, 1, 0
  %v247 = vsel %vm231, 1, 0
  %v248 = vsel %vm232, 1, 0
  %v249 = vsel %vm233, 1, 0
  %v250 = vsel %vm234, 1, 0
  %v251 = vsel %vm235, 1, 0
  %v252 = vsel %vm236, 1, 0
  %v253 = vsel %vm237, 1, 0
  %v254 = vsel %vm238, 1, 0
  %v255 = vsel %vm239, 1, 0
  %v256 = vsel %vm240, 1, 0
  %v257 = vsel %vm241, 1, 0
  %v258 = vsel %vm242, 1, 0
  %v259 = vsel %vm243, 1, 0
  %v260 = vcvt.s32.f32 %v244
  %v261 = vcvt.s32.f32 %v245
  %v262 = vcvt.s32.f32 %v246
  %v263 = vcvt.s32.f32 %v247
  %v264 = vcvt.s32.f32 %v248
  %v265 = vcvt.s32.f32 %v249
  %v266 = vcvt.s32.f32 %v250
  %v267 = vcvt.s32.f32 %v251
  %v268 = vcvt.s32.f32 %v252
  %v269 = vcvt.s32.f32 %v253
  %v270 = vcvt.s32.f32 %v254
  %v271 = vcvt.s32.f32 %v255
  %v272 = vcvt.s32.f32 %v256
  %v273 = vcvt.s32.f32 %v257
  %v274 = vcvt.s32.f32 %v258
  %v275 = vcvt.s32.f32 %v259
  %v276 = vmul.f32 %v137, %v260
  %v277 = vmul.f32 %v139, %v261
  %v278 = vmul.f32 %v142, %v262
  %v279 = vmul.f32 %v144, %v263
  %v280 = vmul.f32 %v147, %v264
  %v281 = vmul.f32 %v149, %v265
  %v282 = vmul.f32 %v152, %v266
  %v283 = vmul.f32 %v154, %v267
  %v284 = vmul.f32 %v157, %v268
  %v285 = vmul.f32 %v159, %v269
  %v286 = vmul.f32 %v162, %v270
  %v287 = vmul.f32 %v164, %v271
  %v288 = vmul.f32 %v167, %v272
  %v289 = vmul.f32 %v169, %v273
  %v290 = vmul.f32 %v172, %v274
  %v291 = vmul.f32 %v174, %v275
  %v292 = vsel %vm176, %v276, 0.0
  %v293 = vsel %vm176, %v277, 0.0
  %v294 = vadd.f32 %v292, %v293
  %v295 = vsel %vm176, %v278, 0.0
  %v296 = vadd.f32 %v294, %v295
  %v297 = vsel %vm176, %v279, 0.0
  %v298 = vadd.f32 %v296, %v297
  %v299 = vsel %vm176, %v280, 0.0
  %v300 = vadd.f32 %v298, %v299
  %v301 = vsel %vm176, %v281, 0.0
  %v302 = vadd.f32 %v300, %v301
  %v303 = vsel %vm176, %v282, 0.0
  %v304 = vadd.f32 %v302, %v303
  %v305 = vsel %vm176, %v283, 0.0
  %v306 = vadd.f32 %v304, %v305
  %v307 = vsel %vm176, %v284, 0.0
  %v308 = vadd.f32 %v306, %v307
  %v309 = vsel %vm176, %v285, 0.0
  %v310 = vadd.f32 %v308, %v309
  %v311 = vsel %vm176, %v286, 0.0
  %v312 = vadd.f32 %v310, %v311
  %v313 = vsel %vm176, %v287, 0.0
  %v314 = vadd.f32 %v312, %v313
  %v315 = vsel %vm176, %v288, 0.0
  %v316 = vadd.f32 %v314, %v315
  %v317 = vsel %vm176, %v289, 0.0
  %v318 = vadd.f32 %v316, %v317
  %v319 = vsel %vm176, %v290, 0.0
  %v320 = vadd.f32 %v318, %v319
  %v321 = vsel %vm176, %v291, 0.0
  %v322 = vadd.f32 %v320, %v321
  %v323 = vrot.slane %v322, 4
  %v324 = vadd.f32 %v322, %v323
  %v325 = vrot.slane %v324, 2
  %v326 = vadd.f32 %v324, %v325
  %v327 = vrot.slane %v326, 1
  %v328 = vadd.f32 %v326, %v327
  %vm329 = vcmask 516096
  %330 = vst.msk [vmem:[%s4] sm:$0x1] %vm329, %v328
  %v331 = vmul.f32 %v276, %v276
  %v332 = vmul.f32 %v277, %v277
  %v333 = vmul.f32 %v278, %v278
  %v334 = vmul.f32 %v279, %v279
  %v335 = vmul.f32 %v280, %v280
  %v336 = vmul.f32 %v281, %v281
  %v337 = vmul.f32 %v282, %v282
  %v338 = vmul.f32 %v283, %v283
  %v339 = vmul.f32 %v284, %v284
  %v340 = vmul.f32 %v285, %v285
  %v341 = vmul.f32 %v286, %v286
  %v342 = vmul.f32 %v287, %v287
  %v343 = vmul.f32 %v288, %v288
  %v344 = vmul.f32 %v289, %v289
  %v345 = vmul.f32 %v290, %v290
  %v346 = vmul.f32 %v291, %v291
  %v347 = vsel %vm176, %v331, 0.0
  %v348 = vsel %vm176, %v332, 0.0
  %v349 = vadd.f32 %v347, %v348
  %v350 = vsel %vm176, %v333, 0.0
  %v351 = vadd.f32 %v349, %v350
  %v352 = vsel %vm176, %v334, 0.0
  %v353 = vadd.f32 %v351, %v352
  %v354 = vsel %vm176, %v335, 0.0
  %v355 = vadd.f32 %v353, %v354
  %v356 = vsel %vm176, %v336, 0.0
  %v357 = vadd.f32 %v355, %v356
  %v358 = vsel %vm176, %v337, 0.0
  %v359 = vadd.f32 %v357, %v358
  %v360 = vsel %vm176, %v338, 0.0
  %v361 = vadd.f32 %v359, %v360
  %v362 = vsel %vm176, %v339, 0.0
  %v363 = vadd.f32 %v361, %v362
  %v364 = vsel %vm176, %v340, 0.0
  %v365 = vadd.f32 %v363, %v364
  %v366 = vsel %vm176, %v341, 0.0
  %v367 = vadd.f32 %v365, %v366
  %v368 = vsel %vm176, %v342, 0.0
  %v369 = vadd.f32 %v367, %v368
  %v370 = vsel %vm176, %v343, 0.0
  %v371 = vadd.f32 %v369, %v370
  %v372 = vsel %vm176, %v344, 0.0
  %v373 = vadd.f32 %v371, %v372
  %v374 = vsel %vm176, %v345, 0.0
  %v375 = vadd.f32 %v373, %v374
  %v376 = vsel %vm176, %v346, 0.0
  %v377 = vadd.f32 %v375, %v376
  %v378 = vrot.slane %v377, 4
  %v379 = vadd.f32 %v377, %v378
  %v380 = vrot.slane %v379, 2
  %v381 = vadd.f32 %v379, %v380
  %v382 = vrot.slane %v381, 1
  %v383 = vadd.f32 %v381, %v382
  %384 = vst.msk [vmem:[%s5] sm:$0x1] %vm329, %v383
  // Predicated region
  $region14: #{_lambda_.7} parent=0 // pred_check
    _
  $region15: #{_lambda_.7} parent=0 // pred_check_branch
    %386 = sbr.rel (0) target = $region17
  $region16: #{_lambda_.7} parent=0 // pred_region
    _
  $region17: #{_lambda_.7} parent=0 // pred_fallthru
    _
  // Predicated region
  $region18: #{_lambda_.7} parent=0 // pred_check
    _
  $region19: #{_lambda_.7} parent=0 // pred_check_branch
    %388 = sbr.rel (0) target = $region21
  $region20: #{_lambda_.7} parent=0 // pred_region
    _
  $region21: #{_lambda_.7} parent=0 // pred_fallthru
    _
  // Predicated region
  $region22: #{_lambda_.7} parent=0 // pred_check
    _
  $region23: #{_lambda_.7} parent=0 // pred_check_branch
    %390 = sbr.rel (0) target = $region25
  $region24: #{_lambda_.7} parent=0 // pred_region
    _
  $region25: #{_lambda_.7} parent=0 // pred_fallthru
    _
  // Predicated region
  $region26: #{_lambda_.7} parent=0 // pred_check
    _
  $region27: #{_lambda_.7} parent=0 // pred_check_branch
    %392 = sbr.rel (0) target = $region29
  $region28: #{_lambda_.7} parent=0 // pred_region
    _
  $region29: #{_lambda_.7} parent=0 // pred_fallthru
    _
  // Predicated region
  $region30: #{_lambda_.7} parent=0 // pred_check
    _
  $region31: #{_lambda_.7} parent=0 // pred_check_branch
    %394 = sbr.rel (0) target = $region33
  $region32: #{_lambda_.7} parent=0 // pred_region
    _
  $region33: #{_lambda_.7} parent=0 // pred_fallthru
    _
  // Predicated region
  $region34: #{_lambda_.7} parent=0 // pred_check
    _
  $region35: #{_lambda_.7} parent=0 // pred_check_branch
    %396 = sbr.rel (0) target = $region37
  $region36: #{_lambda_.7} parent=0 // pred_region
    _
  $region37: #{_lambda_.7} parent=0 // pred_fallthru
    _

// kernel: _lambda_.12
$region0: #{_lambda_.12}
  #allocation0 [shape = 'u32[]', space=smem, size = 0x4, offset = 0x4, fixed_abs, tag = 'smem constant byte address 0x4 - core index']
  #allocation1 [shape = 'u32[72,128]{1,0:T(1,128)}', space=vmem, size = 0x9000, scoped, tag = 'internal scratch']
  %s0 = inlined_call_operand.vmem [shape: f32[128,64], index: 0, kind: input, shape index: {}]
  %s1 = inlined_call_operand.vmem [shape: f32[1,1,64], index: 1, kind: input, shape index: {}]
  %s2 = inlined_call_operand.vmem [shape: f32[1,1,64], index: 2, kind: input, shape index: {}]
  %s3 = inlined_call_operand.vmem [shape: f32[1,64], index: 3, kind: input, shape index: {}]
  %s4 = inlined_call_operand.vmem [shape: f32[1,64], index: 4, kind: input, shape index: {}]
  %s5 = inlined_call_operand.vmem [shape: bf16[64,32], index: 5, kind: input, shape index: {}]
  %s6 = inlined_call_operand.vmem [shape: f32[1,32], index: 6, kind: input, shape index: {}]
  %s7 = inlined_call_operand.vmem [shape: f32[128,32], index: 7, kind: output, shape index: {0}]
  %s8 = inlined_call_operand.vmem [shape: f32[1,1,32], index: 8, kind: output, shape index: {1}]
  %s9 = inlined_call_operand.vmem [shape: f32[1,1,32], index: 9, kind: output, shape index: {2}]
  %10 = xla_tuple %s7, %s8, %s9
  %s11 = sld [smem:[#allocation0]]
  $region54: #{_lambda_.12} parent=0
    _
  %s13 = ssub.s32 1, %s11
  %s14 = scalar_select 0, %s13, %s11
  // Predicated region
  $region2: #{_lambda_.12} parent=0 // pred_check
    _
  $region3: #{_lambda_.12} parent=0 // pred_check_branch
    %16 = sbr.rel (0) target = $region5
  $region4: #{_lambda_.12} parent=0 // pred_region
    _
  $region5: #{_lambda_.12} parent=0 // pred_fallthru
    _
  // Predicated region
  $region6: #{_lambda_.12} parent=0 // pred_check
    _
  $region7: #{_lambda_.12} parent=0 // pred_check_branch
    %18 = sbr.rel (0) target = $region9
  $region8: #{_lambda_.12} parent=0 // pred_region
    _
  $region9: #{_lambda_.12} parent=0 // pred_fallthru
    _
  // Predicated region
  $region10: #{_lambda_.12} parent=0 // pred_check
    _
  $region11: #{_lambda_.12} parent=0 // pred_check_branch
    %20 = sbr.rel (0) target = $region13
  $region12: #{_lambda_.12} parent=0 // pred_region
    _
  $region13: #{_lambda_.12} parent=0 // pred_fallthru
    _
  // Predicated region
  $region14: #{_lambda_.12} parent=0 // pred_check
    _
  $region15: #{_lambda_.12} parent=0 // pred_check_branch
    %22 = sbr.rel (0) target = $region17
  $region16: #{_lambda_.12} parent=0 // pred_region
    _
  $region17: #{_lambda_.12} parent=0 // pred_fallthru
    _
  // Predicated region
  $region18: #{_lambda_.12} parent=0 // pred_check
    _
  $region19: #{_lambda_.12} parent=0 // pred_check_branch
    %24 = sbr.rel (0) target = $region21
  $region20: #{_lambda_.12} parent=0 // pred_region
    _
  $region21: #{_lambda_.12} parent=0 // pred_fallthru
    _
  // Predicated region
  $region22: #{_lambda_.12} parent=0 // pred_check
    _
  $region23: #{_lambda_.12} parent=0 // pred_check_branch
    %26 = sbr.rel (0) target = $region25
  $region24: #{_lambda_.12} parent=0 // pred_region
    _
  $region25: #{_lambda_.12} parent=0 // pred_fallthru
    _
  // Predicated region
  $region26: #{_lambda_.12} parent=0 // pred_check
    _
  $region27: #{_lambda_.12} parent=0 // pred_check_branch
    %28 = sbr.rel (0) target = $region29
  $region28: #{_lambda_.12} parent=0 // pred_region
    _
  $region29: #{_lambda_.12} parent=0 // pred_fallthru
    _
  %v30 = vld [vmem:[%s1] sm:$0x1]
  %v31 = vadd.f32 %v30, 0.0
  %v32 = vmul.f32 %v31, 0.0078125
  %v33 = vld [vmem:[%s2] sm:$0x1]
  %v34 = vadd.f32 %v33, 0.0
  %v35 = vmul.f32 %v34, 0.0078125
  %v36 = vmul.f32 %v32, %v32
  %v37 = vsub.f32 %v35, %v36
  %v38 = vld [vmem:[%s3] sm:$0x1]
  %v39 = vadd.f32 %v37, 1e-05
  %v40 = vrsqrt.pop %v39
  %v41 = vmul.f32 %v40, %v39
  %v42 = vmul.f32 %v41, %v40
  %v43 = vmul.f32 0.5, %v42
  %v44 = vsub.f32 1.5, %v43
  %v45 = vmul.f32 %v40, %v44
  %vm46 = vweird.f32 %v39
  %vm47 = vweird.f32 %v40
  %vm48 = vmor %vm46, %vm47
  %v49 = vsel %vm48, %v40, %v45
  %v50 = vmul.f32 %v38, %v49
  %v51 = vld [vmem:[%s4] sm:$0x1]
  %v52 = vmul.f32 %v32, %v50
  %v53 = vsub.f32 %v51, %v52
  %v54 = vld [vmem:[%s0] sm:$0xff]
  %v55 = vld [vmem:[%s0 + $0x8] sm:$0xff]
  %v56 = vld [vmem:[%s0 + $0x10] sm:$0xff]
  %v57 = vld [vmem:[%s0 + $0x18] sm:$0xff]
  %v58 = vld [vmem:[%s0 + $0x20] sm:$0xff]
  %v59 = vld [vmem:[%s0 + $0x28] sm:$0xff]
  %v60 = vld [vmem:[%s0 + $0x30] sm:$0xff]
  %v61 = vld [vmem:[%s0 + $0x38] sm:$0xff]
  %v62 = vld [vmem:[%s0 + $0x40] sm:$0xff]
  %v63 = vld [vmem:[%s0 + $0x48] sm:$0xff]
  %v64 = vld [vmem:[%s0 + $0x50] sm:$0xff]
  %v65 = vld [vmem:[%s0 + $0x58] sm:$0xff]
  %v66 = vld [vmem:[%s0 + $0x60] sm:$0xff]
  %v67 = vld [vmem:[%s0 + $0x68] sm:$0xff]
  %v68 = vld [vmem:[%s0 + $0x70] sm:$0xff]
  %v69 = vld [vmem:[%s0 + $0x78] sm:$0xff]
  %v71 = vperm.slane %v50, 0
  %v73 = vmul.f32 %v54, %v71
  %v74 = vmul.f32 %v55, %v71
  %v75 = vmul.f32 %v56, %v71
  %v76 = vmul.f32 %v57, %v71
  %v77 = vmul.f32 %v58, %v71
  %v78 = vmul.f32 %v59, %v71
  %v79 = vmul.f32 %v60, %v71
  %v80 = vmul.f32 %v61, %v71
  %v81 = vmul.f32 %v62, %v71
  %v82 = vmul.f32 %v63, %v71
  %v83 = vmul.f32 %v64, %v71
  %v84 = vmul.f32 %v65, %v71
  %v85 = vmul.f32 %v66, %v71
  %v86 = vmul.f32 %v67, %v71
  %v87 = vmul.f32 %v68, %v71
  %v88 = vmul.f32 %v69, %v71
  %v90 = vperm.slane %v53, 0
  %v92 = vadd.f32 %v73, %v90
  %v93 = vadd.f32 %v74, %v90
  %v94 = vadd.f32 %v75, %v90
  %v95 = vadd.f32 %v76, %v90
  %v96 = vadd.f32 %v77, %v90
  %v97 = vadd.f32 %v78, %v90
  %v98 = vadd.f32 %v79, %v90
  %v99 = vadd.f32 %v80, %v90
  %v100 = vadd.f32 %v81, %v90
  %v101 = vadd.f32 %v82, %v90
  %v102 = vadd.f32 %v83, %v90
  %v103 = vadd.f32 %v84, %v90
  %v104 = vadd.f32 %v85, %v90
  %v105 = vadd.f32 %v86, %v90
  %v106 = vadd.f32 %v87, %v90
  %v107 = vadd.f32 %v88, %v90
  %v108 = vmax.f32 %v92, 0.0
  %v109 = vmax.f32 %v93, 0.0
  %v110 = vmax.f32 %v94, 0.0
  %v111 = vmax.f32 %v95, 0.0
  %v112 = vmax.f32 %v96, 0.0
  %v113 = vmax.f32 %v97, 0.0
  %v114 = vmax.f32 %v98, 0.0
  %v115 = vmax.f32 %v99, 0.0
  %v116 = vmax.f32 %v100, 0.0
  %v117 = vmax.f32 %v101, 0.0
  %v118 = vmax.f32 %v102, 0.0
  %v119 = vmax.f32 %v103, 0.0
  %v120 = vmax.f32 %v104, 0.0
  %v121 = vmax.f32 %v105, 0.0
  %v122 = vmax.f32 %v106, 0.0
  %v123 = vmax.f32 %v107, 0.0
  %v124 = vpack.c.bf16 %v109, %v108
  %v125 = vpack.c.bf16 %v111, %v110
  %v126 = vpack.c.bf16 %v113, %v112
  %v127 = vpack.c.bf16 %v115, %v114
  %v128 = vpack.c.bf16 %v117, %v116
  %v129 = vpack.c.bf16 %v119, %v118
  %v130 = vpack.c.bf16 %v121, %v120
  %v131 = vpack.c.bf16 %v123, %v122
  %v132 = vld [vmem:[%s5] sm:$0xf]
  %v133 = vld [vmem:[%s5 + $0x4] sm:$0xf]
  %v134 = vld [vmem:[%s5 + $0x8] sm:$0xf]
  %v135 = vld [vmem:[%s5 + $0xc] sm:$0xf]
  %v136 = vld [vmem:[%s5 + $0x10] sm:$0xf]
  %v137 = vld [vmem:[%s5 + $0x14] sm:$0xf]
  %v138 = vld [vmem:[%s5 + $0x18] sm:$0xf]
  %v139 = vld [vmem:[%s5 + $0x1c] sm:$0xf]
  %v140 = vld [vmem:[%s6] sm:$0x1]
  %v142 = vperm.slane %v140, 0
  %v152 = vunpack.c.l.b16 %v132
  %v153 = vunpack.c.l.b16 %v133
  %v154 = vunpack.c.l.b16 %v134
  %v155 = vunpack.c.l.b16 %v135
  %v156 = vunpack.c.l.b16 %v136
  %v157 = vunpack.c.l.b16 %v137
  %v158 = vunpack.c.l.b16 %v138
  %v159 = vunpack.c.l.b16 %v139
  %v160 = vpack.c.b16 %v153, %v152
  %v161 = vpack.c.b16 %v155, %v154
  %v162 = vpack.c.b16 %v157, %v156
  %v163 = vpack.c.b16 %v159, %v158
  %vm168 = vcmask 523264
  %v170 = vsel %vm168, %v124, 0
  %v173 = vsel %vm168, %v125, 0
  %v176 = vsel %vm168, %v126, 0
  %v179 = vsel %vm168, %v127, 0
  %v182 = vsel %vm168, %v128, 0
  %v185 = vsel %vm168, %v129, 0
  %v188 = vsel %vm168, %v130, 0
  %v191 = vsel %vm168, %v131, 0
  %193 = vmatpush.bf16.msra.mxu0 0
  %194 = vmatpush.bf16.msra.mxu0 0
  %195 = vmatpush.bf16.msra.mxu0 0
  %196 = vmatpush.bf16.msra.mxu0 0
  %197 = vmatpush.bf16.msra.mxu0 %v163
  %198 = vmatpush.bf16.msra.mxu0 %v162
  %199 = vmatpush.bf16.msra.mxu0 %v161
  %200 = vmatpush.bf16.msra.mxu0 %v160
  %201 = vmatmul.bf16.gmra.mxu0 %v170
  %v202 = vpop.f32.mrf.mxu0
  %v203 = vadd.f32 %v142, %v202
  %v204 = vpop.f32.mrf.mxu0
  %v205 = vadd.f32 %v142, %v204
  %206 = vmatmul.bf16.gmra.mxu0 %v173
  %v207 = vpop.f32.mrf.mxu0
  %v208 = vadd.f32 %v142, %v207
  %v209 = vpop.f32.mrf.mxu0
  %v210 = vadd.f32 %v142, %v209
  %211 = vmatmul.bf16.gmra.mxu0 %v176
  %v212 = vpop.f32.mrf.mxu0
  %v213 = vadd.f32 %v142, %v212
  %v214 = vpop.f32.mrf.mxu0
  %v215 = vadd.f32 %v142, %v214
  %216 = vmatmul.bf16.gmra.mxu0 %v179
  %v217 = vpop.f32.mrf.mxu0
  %v218 = vadd.f32 %v142, %v217
  %v219 = vpop.f32.mrf.mxu0
  %v220 = vadd.f32 %v142, %v219
  %221 = vmatmul.bf16.gmra.mxu0 %v182
  %v222 = vpop.f32.mrf.mxu0
  %v223 = vadd.f32 %v142, %v222
  %v224 = vpop.f32.mrf.mxu0
  %v225 = vadd.f32 %v142, %v224
  %226 = vmatmul.bf16.gmra.mxu0 %v185
  %v227 = vpop.f32.mrf.mxu0
  %v228 = vadd.f32 %v142, %v227
  %v229 = vpop.f32.mrf.mxu0
  %v230 = vadd.f32 %v142, %v229
  %231 = vmatmul.bf16.gmra.mxu0 %v188
  %v232 = vpop.f32.mrf.mxu0
  %v233 = vadd.f32 %v142, %v232
  %v234 = vpop.f32.mrf.mxu0
  %v235 = vadd.f32 %v142, %v234
  %236 = vmatmul.bf16.gmra.mxu0 %v191
  %v237 = vpop.f32.mrf.mxu0
  %v238 = vadd.f32 %v142, %v237
  %v239 = vpop.f32.mrf.mxu0
  %v240 = vadd.f32 %v142, %v239
  %241 = vdwg.mxu0
  %vm242 = vcmask 261120
  %243 = vst.msk [vmem:[%s7] sm:$0xff] %vm242, %v203
  %244 = vst.msk [vmem:[%s7 + $0x8] sm:$0xff] %vm242, %v205
  %245 = vst.msk [vmem:[%s7 + $0x10] sm:$0xff] %vm242, %v208
  %246 = vst.msk [vmem:[%s7 + $0x18] sm:$0xff] %vm242, %v210
  %247 = vst.msk [vmem:[%s7 + $0x20] sm:$0xff] %vm242, %v213
  %248 = vst.msk [vmem:[%s7 + $0x28] sm:$0xff] %vm242, %v215
  %249 = vst.msk [vmem:[%s7 + $0x30] sm:$0xff] %vm242, %v218
  %250 = vst.msk [vmem:[%s7 + $0x38] sm:$0xff] %vm242, %v220
  %251 = vst.msk [vmem:[%s7 + $0x40] sm:$0xff] %vm242, %v223
  %252 = vst.msk [vmem:[%s7 + $0x48] sm:$0xff] %vm242, %v225
  %253 = vst.msk [vmem:[%s7 + $0x50] sm:$0xff] %vm242, %v228
  %254 = vst.msk [vmem:[%s7 + $0x58] sm:$0xff] %vm242, %v230
  %255 = vst.msk [vmem:[%s7 + $0x60] sm:$0xff] %vm242, %v233
  %256 = vst.msk [vmem:[%s7 + $0x68] sm:$0xff] %vm242, %v235
  %257 = vst.msk [vmem:[%s7 + $0x70] sm:$0xff] %vm242, %v238
  %258 = vst.msk [vmem:[%s7 + $0x78] sm:$0xff] %vm242, %v240
  %s259 = smul.u32 0, 128
  %v260 = vlaneseq
  %v261 = vshrl.u32 %v260, 7
  %v262 = vadd.s32 %v261, 8
  %v263 = vadd.s32 %v261, 16
  %v264 = vadd.s32 %v261, 24
  %v265 = vadd.s32 %v261, 32
  %v266 = vadd.s32 %v261, 40
  %v267 = vadd.s32 %v261, 48
  %v268 = vadd.s32 %v261, 56
  %v269 = vadd.s32 %v261, 64
  %v270 = vadd.s32 %v261, 72
  %v271 = vadd.s32 %v261, 80
  %v272 = vadd.s32 %v261, 88
  %v273 = vadd.s32 %v261, 96
  %v274 = vadd.s32 %v261, 104
  %v275 = vadd.s32 %v261, 112
  %v276 = vadd.s32 %v261, 120
  %v277 = vstv %s259
  %v278 = vadd.s32 %v277, %v261
  %v279 = vadd.s32 %v277, %v262
  %v280 = vadd.s32 %v277, %v263
  %v281 = vadd.s32 %v277, %v264
  %v282 = vadd.s32 %v277, %v265
  %v283 = vadd.s32 %v277, %v266
  %v284 = vadd.s32 %v277, %v267
  %v285 = vadd.s32 %v277, %v268
  %v286 = vadd.s32 %v277, %v269
  %v287 = vadd.s32 %v277, %v270
  %v288 = vadd.s32 %v277, %v271
  %v289 = vadd.s32 %v277, %v272
  %v290 = vadd.s32 %v277, %v273
  %v291 = vadd.s32 %v277, %v274
  %v292 = vadd.s32 %v277, %v275
  %v293 = vadd.s32 %v277, %v276
  %vm294 = vcmp.lt.s32.totalorder %v278, 128
  %vm295 = vcmp.lt.s32.totalorder %v279, 128
  %vm296 = vcmp.lt.s32.totalorder %v280, 128
  %vm297 = vcmp.lt.s32.totalorder %v281, 128
  %vm298 = vcmp.lt.s32.totalorder %v282, 128
  %vm299 = vcmp.lt.s32.totalorder %v283, 128
  %vm300 = vcmp.lt.s32.totalorder %v284, 128
  %vm301 = vcmp.lt.s32.totalorder %v285, 128
  %vm302 = vcmp.lt.s32.totalorder %v286, 128
  %vm303 = vcmp.lt.s32.totalorder %v287, 128
  %vm304 = vcmp.lt.s32.totalorder %v288, 128
  %vm305 = vcmp.lt.s32.totalorder %v289, 128
  %vm306 = vcmp.lt.s32.totalorder %v290, 128
  %vm307 = vcmp.lt.s32.totalorder %v291, 128
  %vm308 = vcmp.lt.s32.totalorder %v292, 128
  %vm309 = vcmp.lt.s32.totalorder %v293, 128
  %v310 = vsel %vm294, 1, 0
  %v311 = vsel %vm295, 1, 0
  %v312 = vsel %vm296, 1, 0
  %v313 = vsel %vm297, 1, 0
  %v314 = vsel %vm298, 1, 0
  %v315 = vsel %vm299, 1, 0
  %v316 = vsel %vm300, 1, 0
  %v317 = vsel %vm301, 1, 0
  %v318 = vsel %vm302, 1, 0
  %v319 = vsel %vm303, 1, 0
  %v320 = vsel %vm304, 1, 0
  %v321 = vsel %vm305, 1, 0
  %v322 = vsel %vm306, 1, 0
  %v323 = vsel %vm307, 1, 0
  %v324 = vsel %vm308, 1, 0
  %v325 = vsel %vm309, 1, 0
  %v326 = vcvt.s32.f32 %v310
  %v327 = vcvt.s32.f32 %v311
  %v328 = vcvt.s32.f32 %v312
  %v329 = vcvt.s32.f32 %v313
  %v330 = vcvt.s32.f32 %v314
  %v331 = vcvt.s32.f32 %v315
  %v332 = vcvt.s32.f32 %v316
  %v333 = vcvt.s32.f32 %v317
  %v334 = vcvt.s32.f32 %v318
  %v335 = vcvt.s32.f32 %v319
  %v336 = vcvt.s32.f32 %v320
  %v337 = vcvt.s32.f32 %v321
  %v338 = vcvt.s32.f32 %v322
  %v339 = vcvt.s32.f32 %v323
  %v340 = vcvt.s32.f32 %v324
  %v341 = vcvt.s32.f32 %v325
  %v342 = vmul.f32 %v203, %v326
  %v343 = vmul.f32 %v205, %v327
  %v344 = vmul.f32 %v208, %v328
  %v345 = vmul.f32 %v210, %v329
  %v346 = vmul.f32 %v213, %v330
  %v347 = vmul.f32 %v215, %v331
  %v348 = vmul.f32 %v218, %v332
  %v349 = vmul.f32 %v220, %v333
  %v350 = vmul.f32 %v223, %v334
  %v351 = vmul.f32 %v225, %v335
  %v352 = vmul.f32 %v228, %v336
  %v353 = vmul.f32 %v230, %v337
  %v354 = vmul.f32 %v233, %v338
  %v355 = vmul.f32 %v235, %v339
  %v356 = vmul.f32 %v238, %v340
  %v357 = vmul.f32 %v240, %v341
  %v358 = vsel %vm242, %v342, 0.0
  %v359 = vsel %vm242, %v343, 0.0
  %v360 = vadd.f32 %v358, %v359
  %v361 = vsel %vm242, %v344, 0.0
  %v362 = vadd.f32 %v360, %v361
  %v363 = vsel %vm242, %v345, 0.0
  %v364 = vadd.f32 %v362, %v363
  %v365 = vsel %vm242, %v346, 0.0
  %v366 = vadd.f32 %v364, %v365
  %v367 = vsel %vm242, %v347, 0.0
  %v368 = vadd.f32 %v366, %v367
  %v369 = vsel %vm242, %v348, 0.0
  %v370 = vadd.f32 %v368, %v369
  %v371 = vsel %vm242, %v349, 0.0
  %v372 = vadd.f32 %v370, %v371
  %v373 = vsel %vm242, %v350, 0.0
  %v374 = vadd.f32 %v372, %v373
  %v375 = vsel %vm242, %v351, 0.0
  %v376 = vadd.f32 %v374, %v375
  %v377 = vsel %vm242, %v352, 0.0
  %v378 = vadd.f32 %v376, %v377
  %v379 = vsel %vm242, %v353, 0.0
  %v380 = vadd.f32 %v378, %v379
  %v381 = vsel %vm242, %v354, 0.0
  %v382 = vadd.f32 %v380, %v381
  %v383 = vsel %vm242, %v355, 0.0
  %v384 = vadd.f32 %v382, %v383
  %v385 = vsel %vm242, %v356, 0.0
  %v386 = vadd.f32 %v384, %v385
  %v387 = vsel %vm242, %v357, 0.0
  %v388 = vadd.f32 %v386, %v387
  %v389 = vrot.slane %v388, 4
  %v390 = vadd.f32 %v388, %v389
  %v391 = vrot.slane %v390, 2
  %v392 = vadd.f32 %v390, %v391
  %v393 = vrot.slane %v392, 1
  %v394 = vadd.f32 %v392, %v393
  %vm395 = vcmask 253952
  %396 = vst.msk [vmem:[%s8] sm:$0x1] %vm395, %v394
  %v397 = vmul.f32 %v342, %v342
  %v398 = vmul.f32 %v343, %v343
  %v399 = vmul.f32 %v344, %v344
  %v400 = vmul.f32 %v345, %v345
  %v401 = vmul.f32 %v346, %v346
  %v402 = vmul.f32 %v347, %v347
  %v403 = vmul.f32 %v348, %v348
  %v404 = vmul.f32 %v349, %v349
  %v405 = vmul.f32 %v350, %v350
  %v406 = vmul.f32 %v351, %v351
  %v407 = vmul.f32 %v352, %v352
  %v408 = vmul.f32 %v353, %v353
  %v409 = vmul.f32 %v354, %v354
  %v410 = vmul.f32 %v355, %v355
  %v411 = vmul.f32 %v356, %v356
  %v412 = vmul.f32 %v357, %v357
  %v413 = vsel %vm242, %v397, 0.0
  %v414 = vsel %vm242, %v398, 0.0
  %v415 = vadd.f32 %v413, %v414
  %v416 = vsel %vm242, %v399, 0.0
  %v417 = vadd.f32 %v415, %v416
  %v418 = vsel %vm242, %v400, 0.0
  %v419 = vadd.f32 %v417, %v418
  %v420 = vsel %vm242, %v401, 0.0
  %v421 = vadd.f32 %v419, %v420
  %v422 = vsel %vm242, %v402, 0.0
  %v423 = vadd.f32 %v421, %v422
  %v424 = vsel %vm242, %v403, 0.0
  %v425 = vadd.f32 %v423, %v424
  %v426 = vsel %vm242, %v404, 0.0
  %v427 = vadd.f32 %v425, %v426
  %v428 = vsel %vm242, %v405, 0.0
  %v429 = vadd.f32 %v427, %v428
  %v430 = vsel %vm242, %v406, 0.0
  %v431 = vadd.f32 %v429, %v430
  %v432 = vsel %vm242, %v407, 0.0
  %v433 = vadd.f32 %v431, %v432
  %v434 = vsel %vm242, %v408, 0.0
  %v435 = vadd.f32 %v433, %v434
  %v436 = vsel %vm242, %v409, 0.0
  %v437 = vadd.f32 %v435, %v436
  %v438 = vsel %vm242, %v410, 0.0
  %v439 = vadd.f32 %v437, %v438
  %v440 = vsel %vm242, %v411, 0.0
  %v441 = vadd.f32 %v439, %v440
  %v442 = vsel %vm242, %v412, 0.0
  %v443 = vadd.f32 %v441, %v442
  %v444 = vrot.slane %v443, 4
  %v445 = vadd.f32 %v443, %v444
  %v446 = vrot.slane %v445, 2
  %v447 = vadd.f32 %v445, %v446
  %v448 = vrot.slane %v447, 1
  %v449 = vadd.f32 %v447, %v448
  %450 = vst.msk [vmem:[%s9] sm:$0x1] %vm395, %v449
  // Predicated region
  $region30: #{_lambda_.12} parent=0 // pred_check
    _
  $region31: #{_lambda_.12} parent=0 // pred_check_branch
    %452 = sbr.rel (0) target = $region33
  $region32: #{_lambda_.12} parent=0 // pred_region
    _
  $region33: #{_lambda_.12} parent=0 // pred_fallthru
    _
  // Predicated region
  $region34: #{_lambda_.12} parent=0 // pred_check
    _
  $region35: #{_lambda_.12} parent=0 // pred_check_branch
    %454 = sbr.rel (0) target = $region37
  $region36: #{_lambda_.12} parent=0 // pred_region
    _
  $region37: #{_lambda_.12} parent=0 // pred_fallthru
    _
  // Predicated region
  $region38: #{_lambda_.12} parent=0 // pred_check
    _
  $region39: #{_lambda_.12} parent=0 // pred_check_branch
    %456 = sbr.rel (0) target = $region41
  $region40: #{_lambda_.12} parent=0 // pred_region
    _
  $region41: #{_lambda_.12} parent=0 // pred_fallthru
    _
  // Predicated region
  $region42: #{_lambda_.12} parent=0 // pred_check
    _
  $region43: #{_lambda_.12} parent=0 // pred_check_branch
    %458 = sbr.rel (0) target = $region45
  $region44: #{_lambda_.12} parent=0 // pred_region
    _
  $region45: #{_lambda_.12} parent=0 // pred_fallthru
    _
  // Predicated region
  $region46: #{_lambda_.12} parent=0 // pred_check
    _
  $region47: #{_lambda_.12} parent=0 // pred_check_branch
    %460 = sbr.rel (0) target = $region49
  $region48: #{_lambda_.12} parent=0 // pred_region
    _
  $region49: #{_lambda_.12} parent=0 // pred_fallthru
    _
  // Predicated region
  $region50: #{_lambda_.12} parent=0 // pred_check
    _
  $region51: #{_lambda_.12} parent=0 // pred_check_branch
    %462 = sbr.rel (0) target = $region53
  $region52: #{_lambda_.12} parent=0 // pred_region
    _
  $region53: #{_lambda_.12} parent=0 // pred_fallthru
    _

// kernel: _lambda_.13
$region0: #{_lambda_.13}
  #allocation0 [shape = 'u32[]', space=smem, size = 0x4, offset = 0x4, fixed_abs, tag = 'smem constant byte address 0x4 - core index']
  #allocation1 [shape = 'u32[72,128]{1,0:T(1,128)}', space=vmem, size = 0x9000, scoped, tag = 'internal scratch']
  %s0 = inlined_call_operand.vmem [shape: f32[128,32], index: 0, kind: input, shape index: {}]
  %s1 = inlined_call_operand.vmem [shape: f32[1,1,32], index: 1, kind: input, shape index: {}]
  %s2 = inlined_call_operand.vmem [shape: f32[1,1,32], index: 2, kind: input, shape index: {}]
  %s3 = inlined_call_operand.vmem [shape: f32[1,32], index: 3, kind: input, shape index: {}]
  %s4 = inlined_call_operand.vmem [shape: f32[1,32], index: 4, kind: input, shape index: {}]
  %s5 = inlined_call_operand.hbm [shape: f32[128,32], index: 5, kind: output, shape index: {}]
  %s6 = sld [smem:[#allocation0]]
  $region30: #{_lambda_.13} parent=0
    _
  %s8 = ssub.s32 1, %s6
  %s9 = scalar_select 0, %s8, %s6
  $region1: #{_lambda_.13} parent=0
    #allocation2 [shape = 'u8[65536]{0}', space=vmem, size = 0x10000, scoped, tag = 'output window, operand 0, single buffered']
    #allocation3 [shape = 's32[1]{0}', space=sflag, size = 0x4, scoped, tag = 'scoped memory for _lambda_.13']
    %10 = vsyncpa [#allocation3], 0
    // Predicated region
    $region2: #{_lambda_.13} parent=1 // pred_check
      _
    $region3: #{_lambda_.13} parent=1 // pred_check_branch
      %12 = sbr.rel (0) target = $region5
    $region4: #{_lambda_.13} parent=1 // pred_region
      _
    $region5: #{_lambda_.13} parent=1 // pred_fallthru
      _
    // Predicated region
    $region6: #{_lambda_.13} parent=1 // pred_check
      _
    $region7: #{_lambda_.13} parent=1 // pred_check_branch
      %14 = sbr.rel (0) target = $region9
    $region8: #{_lambda_.13} parent=1 // pred_region
      _
    $region9: #{_lambda_.13} parent=1 // pred_fallthru
      _
    // Predicated region
    $region10: #{_lambda_.13} parent=1 // pred_check
      _
    $region11: #{_lambda_.13} parent=1 // pred_check_branch
      %16 = sbr.rel (0) target = $region13
    $region12: #{_lambda_.13} parent=1 // pred_region
      _
    $region13: #{_lambda_.13} parent=1 // pred_fallthru
      _
    // Predicated region
    $region14: #{_lambda_.13} parent=1 // pred_check
      _
    $region15: #{_lambda_.13} parent=1 // pred_check_branch
      %18 = sbr.rel (0) target = $region17
    $region16: #{_lambda_.13} parent=1 // pred_region
      _
    $region17: #{_lambda_.13} parent=1 // pred_fallthru
      _
    // Predicated region
    $region18: #{_lambda_.13} parent=1 // pred_check
      _
    $region19: #{_lambda_.13} parent=1 // pred_check_branch
      %20 = sbr.rel (0) target = $region21
    $region20: #{_lambda_.13} parent=1 // pred_region
      _
    $region21: #{_lambda_.13} parent=1 // pred_fallthru
      _
    %v21 = vld [vmem:[%s1] sm:$0x1]
    %v22 = vadd.f32 %v21, 0.0
    %v23 = vmul.f32 %v22, 0.0078125
    %v24 = vld [vmem:[%s2] sm:$0x1]
    %v25 = vadd.f32 %v24, 0.0
    %v26 = vmul.f32 %v25, 0.0078125
    %v27 = vmul.f32 %v23, %v23
    %v28 = vsub.f32 %v26, %v27
    %v29 = vld [vmem:[%s3] sm:$0x1]
    %v30 = vadd.f32 %v28, 1e-05
    %v31 = vrsqrt.pop %v30
    %v32 = vmul.f32 %v31, %v30
    %v33 = vmul.f32 %v32, %v31
    %v34 = vmul.f32 0.5, %v33
    %v35 = vsub.f32 1.5, %v34
    %v36 = vmul.f32 %v31, %v35
    %vm37 = vweird.f32 %v30
    %vm38 = vweird.f32 %v31
    %vm39 = vmor %vm37, %vm38
    %v40 = vsel %vm39, %v31, %v36
    %v41 = vmul.f32 %v29, %v40
    %v42 = vld [vmem:[%s4] sm:$0x1]
    %v43 = vmul.f32 %v23, %v41
    %v44 = vsub.f32 %v42, %v43
    %v45 = vld [vmem:[%s0] sm:$0xff]
    %v46 = vld [vmem:[%s0 + $0x8] sm:$0xff]
    %v47 = vld [vmem:[%s0 + $0x10] sm:$0xff]
    %v48 = vld [vmem:[%s0 + $0x18] sm:$0xff]
    %v49 = vld [vmem:[%s0 + $0x20] sm:$0xff]
    %v50 = vld [vmem:[%s0 + $0x28] sm:$0xff]
    %v51 = vld [vmem:[%s0 + $0x30] sm:$0xff]
    %v52 = vld [vmem:[%s0 + $0x38] sm:$0xff]
    %v53 = vld [vmem:[%s0 + $0x40] sm:$0xff]
    %v54 = vld [vmem:[%s0 + $0x48] sm:$0xff]
    %v55 = vld [vmem:[%s0 + $0x50] sm:$0xff]
    %v56 = vld [vmem:[%s0 + $0x58] sm:$0xff]
    %v57 = vld [vmem:[%s0 + $0x60] sm:$0xff]
    %v58 = vld [vmem:[%s0 + $0x68] sm:$0xff]
    %v59 = vld [vmem:[%s0 + $0x70] sm:$0xff]
    %v60 = vld [vmem:[%s0 + $0x78] sm:$0xff]
    %v62 = vperm.slane %v41, 0
    %v64 = vmul.f32 %v45, %v62
    %v65 = vmul.f32 %v46, %v62
    %v66 = vmul.f32 %v47, %v62
    %v67 = vmul.f32 %v48, %v62
    %v68 = vmul.f32 %v49, %v62
    %v69 = vmul.f32 %v50, %v62
    %v70 = vmul.f32 %v51, %v62
    %v71 = vmul.f32 %v52, %v62
    %v72 = vmul.f32 %v53, %v62
    %v73 = vmul.f32 %v54, %v62
    %v74 = vmul.f32 %v55, %v62
    %v75 = vmul.f32 %v56, %v62
    %v76 = vmul.f32 %v57, %v62
    %v77 = vmul.f32 %v58, %v62
    %v78 = vmul.f32 %v59, %v62
    %v79 = vmul.f32 %v60, %v62
    %v81 = vperm.slane %v44, 0
    %v83 = vadd.f32 %v64, %v81
    %v84 = vadd.f32 %v65, %v81
    %v85 = vadd.f32 %v66, %v81
    %v86 = vadd.f32 %v67, %v81
    %v87 = vadd.f32 %v68, %v81
    %v88 = vadd.f32 %v69, %v81
    %v89 = vadd.f32 %v70, %v81
    %v90 = vadd.f32 %v71, %v81
    %v91 = vadd.f32 %v72, %v81
    %v92 = vadd.f32 %v73, %v81
    %v93 = vadd.f32 %v74, %v81
    %v94 = vadd.f32 %v75, %v81
    %v95 = vadd.f32 %v76, %v81
    %v96 = vadd.f32 %v77, %v81
    %v97 = vadd.f32 %v78, %v81
    %v98 = vadd.f32 %v79, %v81
    %v99 = vmax.f32 %v83, 0.0
    %v100 = vmax.f32 %v84, 0.0
    %v101 = vmax.f32 %v85, 0.0
    %v102 = vmax.f32 %v86, 0.0
    %v103 = vmax.f32 %v87, 0.0
    %v104 = vmax.f32 %v88, 0.0
    %v105 = vmax.f32 %v89, 0.0
    %v106 = vmax.f32 %v90, 0.0
    %v107 = vmax.f32 %v91, 0.0
    %v108 = vmax.f32 %v92, 0.0
    %v109 = vmax.f32 %v93, 0.0
    %v110 = vmax.f32 %v94, 0.0
    %v111 = vmax.f32 %v95, 0.0
    %v112 = vmax.f32 %v96, 0.0
    %v113 = vmax.f32 %v97, 0.0
    %v114 = vmax.f32 %v98, 0.0
    %vm115 = vcmask 261120
    %116 = vst.msk [vmem:[#allocation2] sm:$0xff] %vm115, %v99
    %117 = vst.msk [vmem:[#allocation2 + $0x8] sm:$0xff] %vm115, %v100
    %118 = vst.msk [vmem:[#allocation2 + $0x10] sm:$0xff] %vm115, %v101
    %119 = vst.msk [vmem:[#allocation2 + $0x18] sm:$0xff] %vm115, %v102
    %120 = vst.msk [vmem:[#allocation2 + $0x20] sm:$0xff] %vm115, %v103
    %121 = vst.msk [vmem:[#allocation2 + $0x28] sm:$0xff] %vm115, %v104
    %122 = vst.msk [vmem:[#allocation2 + $0x30] sm:$0xff] %vm115, %v105
    %123 = vst.msk [vmem:[#allocation2 + $0x38] sm:$0xff] %vm115, %v106
    %124 = vst.msk [vmem:[#allocation2 + $0x40] sm:$0xff] %vm115, %v107
    %125 = vst.msk [vmem:[#allocation2 + $0x48] sm:$0xff] %vm115, %v108
    %126 = vst.msk [vmem:[#allocation2 + $0x50] sm:$0xff] %vm115, %v109
    %127 = vst.msk [vmem:[#allocation2 + $0x58] sm:$0xff] %vm115, %v110
    %128 = vst.msk [vmem:[#allocation2 + $0x60] sm:$0xff] %vm115, %v111
    %129 = vst.msk [vmem:[#allocation2 + $0x68] sm:$0xff] %vm115, %v112
    %130 = vst.msk [vmem:[#allocation2 + $0x70] sm:$0xff] %vm115, %v113
    %131 = vst.msk [vmem:[#allocation2 + $0x78] sm:$0xff] %vm115, %v114
    // Predicated region
    $region22: #{_lambda_.13} parent=1 // pred_check
      _
    $region23: #{_lambda_.13} parent=1 // pred_check_branch
      %133 = sbr.rel (0) target = $region25
    $region24: #{_lambda_.13} parent=1 // pred_region
      %135 = vsyncadd [#allocation3], 0
      %s136 = sshll.u32 [#allocation2], 4
      %s137 = int_to_ptr.vmem [resolvable:$true] %s136
      %s138 = sshll.u32 %s5, 4
      %s139 = int_to_ptr.hbm [resolvable:$true] %s138
      %144 = dma.vmem_to_hbm [thread:$0]  %s137, 2048, %s139, [#allocation3], 128, 128, 8
    $region25: #{_lambda_.13} parent=1 // pred_fallthru
      _
    // Predicated region
    $region26: #{_lambda_.13} parent=1 // pred_check
      _
    $region27: #{_lambda_.13} parent=1 // pred_check_branch
      %146 = sbr.rel (0) target = $region29
    $region28: #{_lambda_.13} parent=1 // pred_region
      %148 = dma.done [#allocation3], 2048
    $region29: #{_lambda_.13} parent=1 // pred_fallthru
      _
    %149 = vsyncpa [#allocation3], 1

// kernel: _lambda_.9
$region0: #{_lambda_.9}
  #allocation0 [shape = 'u32[]', space=smem, size = 0x4, offset = 0x4, fixed_abs, tag = 'smem constant byte address 0x4 - core index']
  #allocation1 [shape = 'u32[72,128]{1,0:T(1,128)}', space=vmem, size = 0x9000, scoped, tag = 'internal scratch']
  %s0 = inlined_call_operand.vmem [shape: bf16[128,576], index: 0, kind: input, shape index: {}]
  %s1 = inlined_call_operand.vmem [shape: bf16[576,64], index: 1, kind: input, shape index: {}]
  %s2 = inlined_call_operand.vmem [shape: f32[1,64], index: 2, kind: input, shape index: {}]
  %s3 = inlined_call_operand.vmem [shape: f32[128,64], index: 3, kind: output, shape index: {0}]
  %s4 = inlined_call_operand.vmem [shape: f32[1,1,64], index: 4, kind: output, shape index: {1}]
  %s5 = inlined_call_operand.vmem [shape: f32[1,1,64], index: 5, kind: output, shape index: {2}]
  %6 = xla_tuple %s3, %s4, %s5
  %s7 = sld [smem:[#allocation0]]
  $region38: #{_lambda_.9} parent=0
    _
  %s9 = ssub.s32 1, %s7
  %s10 = scalar_select 0, %s9, %s7
  // Predicated region
  $region2: #{_lambda_.9} parent=0 // pred_check
    _
  $region3: #{_lambda_.9} parent=0 // pred_check_branch
    %12 = sbr.rel (0) target = $region5
  $region4: #{_lambda_.9} parent=0 // pred_region
    _
  $region5: #{_lambda_.9} parent=0 // pred_fallthru
    _
  // Predicated region
  $region6: #{_lambda_.9} parent=0 // pred_check
    _
  $region7: #{_lambda_.9} parent=0 // pred_check_branch
    %14 = sbr.rel (0) target = $region9
  $region8: #{_lambda_.9} parent=0 // pred_region
    _
  $region9: #{_lambda_.9} parent=0 // pred_fallthru
    _
  // Predicated region
  $region10: #{_lambda_.9} parent=0 // pred_check
    _
  $region11: #{_lambda_.9} parent=0 // pred_check_branch
    %16 = sbr.rel (0) target = $region13
  $region12: #{_lambda_.9} parent=0 // pred_region
    _
  $region13: #{_lambda_.9} parent=0 // pred_fallthru
    _
  %v18 = vld [vmem:[%s0] sm:$0xff]
  %v19 = vld [vmem:[%s0 + $0x8] sm:$0xff]
  %v20 = vld [vmem:[%s0 + $0x10] sm:$0xf]
  %v21 = vld [vmem:[%s0 + $0x14] sm:$0xff]
  %v22 = vld [vmem:[%s0 + $0x1c] sm:$0xff]
  %v23 = vld [vmem:[%s0 + $0x24] sm:$0xf]
  %v24 = vld [vmem:[%s0 + $0x28] sm:$0xff]
  %v25 = vld [vmem:[%s0 + $0x30] sm:$0xff]
  %v26 = vld [vmem:[%s0 + $0x38] sm:$0xf]
  %v27 = vld [vmem:[%s0 + $0x3c] sm:$0xff]
  %v28 = vld [vmem:[%s0 + $0x44] sm:$0xff]
  %v29 = vld [vmem:[%s0 + $0x4c] sm:$0xf]
  %v30 = vld [vmem:[%s0 + $0x50] sm:$0xff]
  %v31 = vld [vmem:[%s0 + $0x58] sm:$0xff]
  %v32 = vld [vmem:[%s0 + $0x60] sm:$0xf]
  %v33 = vld [vmem:[%s0 + $0x64] sm:$0xff]
  %v34 = vld [vmem:[%s0 + $0x6c] sm:$0xff]
  %v35 = vld [vmem:[%s0 + $0x74] sm:$0xf]
  %v36 = vld [vmem:[%s0 + $0x78] sm:$0xff]
  %v37 = vld [vmem:[%s0 + $0x80] sm:$0xff]
  %v38 = vld [vmem:[%s0 + $0x88] sm:$0xf]
  %v39 = vld [vmem:[%s0 + $0x8c] sm:$0xff]
  %v40 = vld [vmem:[%s0 + $0x94] sm:$0xff]
  %v41 = vld [vmem:[%s0 + $0x9c] sm:$0xf]
  %v42 = vld [vmem:[%s0 + $0xa0] sm:$0xff]
  %v43 = vld [vmem:[%s0 + $0xa8] sm:$0xff]
  %v44 = vld [vmem:[%s0 + $0xb0] sm:$0xf]
  %v45 = vld [vmem:[%s0 + $0xb4] sm:$0xff]
  %v46 = vld [vmem:[%s0 + $0xbc] sm:$0xff]
  %v47 = vld [vmem:[%s0 + $0xc4] sm:$0xf]
  %v48 = vld [vmem:[%s0 + $0xc8] sm:$0xff]
  %v49 = vld [vmem:[%s0 + $0xd0] sm:$0xff]
  %v50 = vld [vmem:[%s0 + $0xd8] sm:$0xf]
  %v51 = vld [vmem:[%s0 + $0xdc] sm:$0xff]
  %v52 = vld [vmem:[%s0 + $0xe4] sm:$0xff]
  %v53 = vld [vmem:[%s0 + $0xec] sm:$0xf]
  %v54 = vld [vmem:[%s0 + $0xf0] sm:$0xff]
  %v55 = vld [vmem:[%s0 + $0xf8] sm:$0xff]
  %v56 = vld [vmem:[%s0 + $0x100] sm:$0xf]
  %v57 = vld [vmem:[%s0 + $0x104] sm:$0xff]
  %v58 = vld [vmem:[%s0 + $0x10c] sm:$0xff]
  %v59 = vld [vmem:[%s0 + $0x114] sm:$0xf]
  %v60 = vld [vmem:[%s0 + $0x118] sm:$0xff]
  %v61 = vld [vmem:[%s0 + $0x120] sm:$0xff]
  %v62 = vld [vmem:[%s0 + $0x128] sm:$0xf]
  %v63 = vld [vmem:[%s0 + $0x12c] sm:$0xff]
  %v64 = vld [vmem:[%s0 + $0x134] sm:$0xff]
  %v65 = vld [vmem:[%s0 + $0x13c] sm:$0xf]
  %v66 = vld [vmem:[%s1] sm:$0xf]
  %v67 = vld [vmem:[%s1 + $0x4] sm:$0xf]
  %v68 = vld [vmem:[%s1 + $0x8] sm:$0xf]
  %v69 = vld [vmem:[%s1 + $0xc] sm:$0xf]
  %v70 = vld [vmem:[%s1 + $0x10] sm:$0xf]
  %v71 = vld [vmem:[%s1 + $0x14] sm:$0xf]
  %v72 = vld [vmem:[%s1 + $0x18] sm:$0xf]
  %v73 = vld [vmem:[%s1 + $0x1c] sm:$0xf]
  %v74 = vld [vmem:[%s1 + $0x20] sm:$0xf]
  %v75 = vld [vmem:[%s1 + $0x24] sm:$0xf]
  %v76 = vld [vmem:[%s1 + $0x28] sm:$0xf]
  %v77 = vld [vmem:[%s1 + $0x2c] sm:$0xf]
  %v78 = vld [vmem:[%s1 + $0x30] sm:$0xf]
  %v79 = vld [vmem:[%s1 + $0x34] sm:$0xf]
  %v80 = vld [vmem:[%s1 + $0x38] sm:$0xf]
  %v81 = vld [vmem:[%s1 + $0x3c] sm:$0xf]
  %v82 = vld [vmem:[%s1 + $0x40] sm:$0xf]
  %v83 = vld [vmem:[%s1 + $0x44] sm:$0xf]
  %v84 = vld [vmem:[%s1 + $0x48] sm:$0xf]
  %v85 = vld [vmem:[%s1 + $0x4c] sm:$0xf]
  %v86 = vld [vmem:[%s1 + $0x50] sm:$0xf]
  %v87 = vld [vmem:[%s1 + $0x54] sm:$0xf]
  %v88 = vld [vmem:[%s1 + $0x58] sm:$0xf]
  %v89 = vld [vmem:[%s1 + $0x5c] sm:$0xf]
  %v90 = vld [vmem:[%s1 + $0x60] sm:$0xf]
  %v91 = vld [vmem:[%s1 + $0x64] sm:$0xf]
  %v92 = vld [vmem:[%s1 + $0x68] sm:$0xf]
  %v93 = vld [vmem:[%s1 + $0x6c] sm:$0xf]
  %v94 = vld [vmem:[%s1 + $0x70] sm:$0xf]
  %v95 = vld [vmem:[%s1 + $0x74] sm:$0xf]
  %v96 = vld [vmem:[%s1 + $0x78] sm:$0xf]
  %v97 = vld [vmem:[%s1 + $0x7c] sm:$0xf]
  %v98 = vld [vmem:[%s1 + $0x80] sm:$0xf]
  %v99 = vld [vmem:[%s1 + $0x84] sm:$0xf]
  %v100 = vld [vmem:[%s1 + $0x88] sm:$0xf]
  %v101 = vld [vmem:[%s1 + $0x8c] sm:$0xf]
  %v102 = vld [vmem:[%s1 + $0x90] sm:$0xf]
  %v103 = vld [vmem:[%s1 + $0x94] sm:$0xf]
  %v104 = vld [vmem:[%s1 + $0x98] sm:$0xf]
  %v105 = vld [vmem:[%s1 + $0x9c] sm:$0xf]
  %v106 = vld [vmem:[%s1 + $0xa0] sm:$0xf]
  %v107 = vld [vmem:[%s1 + $0xa4] sm:$0xf]
  %v108 = vld [vmem:[%s1 + $0xa8] sm:$0xf]
  %v109 = vld [vmem:[%s1 + $0xac] sm:$0xf]
  %v110 = vld [vmem:[%s1 + $0xb0] sm:$0xf]
  %v111 = vld [vmem:[%s1 + $0xb4] sm:$0xf]
  %v112 = vld [vmem:[%s1 + $0xb8] sm:$0xf]
  %v113 = vld [vmem:[%s1 + $0xbc] sm:$0xf]
  %v114 = vld [vmem:[%s1 + $0xc0] sm:$0xf]
  %v115 = vld [vmem:[%s1 + $0xc4] sm:$0xf]
  %v116 = vld [vmem:[%s1 + $0xc8] sm:$0xf]
  %v117 = vld [vmem:[%s1 + $0xcc] sm:$0xf]
  %v118 = vld [vmem:[%s1 + $0xd0] sm:$0xf]
  %v119 = vld [vmem:[%s1 + $0xd4] sm:$0xf]
  %v120 = vld [vmem:[%s1 + $0xd8] sm:$0xf]
  %v121 = vld [vmem:[%s1 + $0xdc] sm:$0xf]
  %v122 = vld [vmem:[%s1 + $0xe0] sm:$0xf]
  %v123 = vld [vmem:[%s1 + $0xe4] sm:$0xf]
  %v124 = vld [vmem:[%s1 + $0xe8] sm:$0xf]
  %v125 = vld [vmem:[%s1 + $0xec] sm:$0xf]
  %v126 = vld [vmem:[%s1 + $0xf0] sm:$0xf]
  %v127 = vld [vmem:[%s1 + $0xf4] sm:$0xf]
  %v128 = vld [vmem:[%s1 + $0xf8] sm:$0xf]
  %v129 = vld [vmem:[%s1 + $0xfc] sm:$0xf]
  %v130 = vld [vmem:[%s1 + $0x100] sm:$0xf]
  %v131 = vld [vmem:[%s1 + $0x104] sm:$0xf]
  %v132 = vld [vmem:[%s1 + $0x108] sm:$0xf]
  %v133 = vld [vmem:[%s1 + $0x10c] sm:$0xf]
  %v134 = vld [vmem:[%s1 + $0x110] sm:$0xf]
  %v135 = vld [vmem:[%s1 + $0x114] sm:$0xf]
  %v136 = vld [vmem:[%s1 + $0x118] sm:$0xf]
  %v137 = vld [vmem:[%s1 + $0x11c] sm:$0xf]
  %v138 = vld [vmem:[%s2] sm:$0x1]
  %v140 = vperm.slane %v138, 0
  %v190 = vunpack.c.l.b16 %v18
  %v191 = vunpack.c.h.b16 %v18
  %v192 = vunpack.c.l.b16 %v19
  %v193 = vunpack.c.h.b16 %v19
  %v194 = vunpack.c.l.b16 %v20
  %v195 = vunpack.c.l.b16 %v21
  %v196 = vunpack.c.h.b16 %v21
  %v197 = vunpack.c.l.b16 %v22
  %v198 = vunpack.c.h.b16 %v22
  %v199 = vunpack.c.l.b16 %v23
  %v200 = vunpack.c.l.b16 %v24
  %v201 = vunpack.c.h.b16 %v24
  %v202 = vunpack.c.l.b16 %v25
  %v203 = vunpack.c.h.b16 %v25
  %v204 = vunpack.c.l.b16 %v26
  %v205 = vunpack.c.l.b16 %v27
  %v206 = vunpack.c.h.b16 %v27
  %v207 = vunpack.c.l.b16 %v28
  %v208 = vunpack.c.h.b16 %v28
  %v209 = vunpack.c.l.b16 %v29
  %v210 = vunpack.c.l.b16 %v30
  %v211 = vunpack.c.h.b16 %v30
  %v212 = vunpack.c.l.b16 %v31
  %v213 = vunpack.c.h.b16 %v31
  %v214 = vunpack.c.l.b16 %v32
  %v215 = vunpack.c.l.b16 %v33
  %v216 = vunpack.c.h.b16 %v33
  %v217 = vunpack.c.l.b16 %v34
  %v218 = vunpack.c.h.b16 %v34
  %v219 = vunpack.c.l.b16 %v35
  %v220 = vunpack.c.l.b16 %v36
  %v221 = vunpack.c.h.b16 %v36
  %v222 = vunpack.c.l.b16 %v37
  %v223 = vunpack.c.h.b16 %v37
  %v224 = vunpack.c.l.b16 %v38
  %v225 = vunpack.c.l.b16 %v39
  %v226 = vunpack.c.h.b16 %v39
  %v227 = vunpack.c.l.b16 %v40
  %v228 = vunpack.c.h.b16 %v40
  %v229 = vunpack.c.l.b16 %v41
  %v230 = vunpack.c.l.b16 %v42
  %v231 = vunpack.c.h.b16 %v42
  %v232 = vunpack.c.l.b16 %v43
  %v233 = vunpack.c.h.b16 %v43
  %v234 = vunpack.c.l.b16 %v44
  %v235 = vunpack.c.l.b16 %v45
  %v236 = vunpack.c.h.b16 %v45
  %v237 = vunpack.c.l.b16 %v46
  %v238 = vunpack.c.h.b16 %v46
  %v239 = vunpack.c.l.b16 %v47
  %v240 = vunpack.c.l.b16 %v48
  %v241 = vunpack.c.h.b16 %v48
  %v242 = vunpack.c.l.b16 %v49
  %v243 = vunpack.c.h.b16 %v49
  %v244 = vunpack.c.l.b16 %v50
  %v245 = vunpack.c.l.b16 %v51
  %v246 = vunpack.c.h.b16 %v51
  %v247 = vunpack.c.l.b16 %v52
  %v248 = vunpack.c.h.b16 %v52
  %v249 = vunpack.c.l.b16 %v53
  %v250 = vunpack.c.l.b16 %v54
  %v251 = vunpack.c.h.b16 %v54
  %v252 = vunpack.c.l.b16 %v55
  %v253 = vunpack.c.h.b16 %v55
  %v254 = vunpack.c.l.b16 %v56
  %v255 = vunpack.c.l.b16 %v57
  %v256 = vunpack.c.h.b16 %v57
  %v257 = vunpack.c.l.b16 %v58
  %v258 = vunpack.c.h.b16 %v58
  %v259 = vunpack.c.l.b16 %v59
  %v260 = vunpack.c.l.b16 %v60
  %v261 = vunpack.c.h.b16 %v60
  %v262 = vunpack.c.l.b16 %v61
  %v263 = vunpack.c.h.b16 %v61
  %v264 = vunpack.c.l.b16 %v62
  %v265 = vunpack.c.l.b16 %v63
  %v266 = vunpack.c.h.b16 %v63
  %v267 = vunpack.c.l.b16 %v64
  %v268 = vunpack.c.h.b16 %v64
  %v269 = vunpack.c.l.b16 %v65
  %v270 = vpack.c.b16 %v195, %v190
  %v271 = vpack.c.b16 %v196, %v191
  %v272 = vpack.c.b16 %v197, %v192
  %v273 = vpack.c.b16 %v198, %v193
  %v274 = vpack.c.b16 %v199, %v194
  %v275 = vpack.c.b16 %v205, %v200
  %v276 = vpack.c.b16 %v206, %v201
  %v277 = vpack.c.b16 %v207, %v202
  %v278 = vpack.c.b16 %v208, %v203
  %v279 = vpack.c.b16 %v209, %v204
  %v280 = vpack.c.b16 %v215, %v210
  %v281 = vpack.c.b16 %v216, %v211
  %v282 = vpack.c.b16 %v217, %v212
  %v283 = vpack.c.b16 %v218, %v213
  %v284 = vpack.c.b16 %v219, %v214
  %v285 = vpack.c.b16 %v225, %v220
  %v286 = vpack.c.b16 %v226, %v221
  %v287 = vpack.c.b16 %v227, %v222
  %v288 = vpack.c.b16 %v228, %v223
  %v289 = vpack.c.b16 %v229, %v224
  %v290 = vpack.c.b16 %v235, %v230
  %v291 = vpack.c.b16 %v236, %v231
  %v292 = vpack.c.b16 %v237, %v232
  %v293 = vpack.c.b16 %v238, %v233
  %v294 = vpack.c.b16 %v239, %v234
  %v295 = vpack.c.b16 %v245, %v240
  %v296 = vpack.c.b16 %v246, %v241
  %v297 = vpack.c.b16 %v247, %v242
  %v298 = vpack.c.b16 %v248, %v243
  %v299 = vpack.c.b16 %v249, %v244
  %v300 = vpack.c.b16 %v255, %v250
  %v301 = vpack.c.b16 %v256, %v251
  %v302 = vpack.c.b16 %v257, %v252
  %v303 = vpack.c.b16 %v258, %v253
  %v304 = vpack.c.b16 %v259, %v254
  %v305 = vpack.c.b16 %v265, %v260
  %v306 = vpack.c.b16 %v266, %v261
  %v307 = vpack.c.b16 %v267, %v262
  %v308 = vpack.c.b16 %v268, %v263
  %v309 = vpack.c.b16 %v269, %v264
  %v414 = vunpack.c.l.b16 %v66
  %v415 = vunpack.c.l.b16 %v67
  %v416 = vunpack.c.l.b16 %v68
  %v417 = vunpack.c.l.b16 %v69
  %v418 = vunpack.c.l.b16 %v70
  %v419 = vunpack.c.l.b16 %v71
  %v420 = vunpack.c.l.b16 %v72
  %v421 = vunpack.c.l.b16 %v73
  %v422 = vunpack.c.l.b16 %v74
  %v423 = vunpack.c.l.b16 %v75
  %v424 = vunpack.c.l.b16 %v76
  %v425 = vunpack.c.l.b16 %v77
  %v426 = vunpack.c.l.b16 %v78
  %v427 = vunpack.c.l.b16 %v79
  %v428 = vunpack.c.l.b16 %v80
  %v429 = vunpack.c.l.b16 %v81
  %v430 = vunpack.c.l.b16 %v82
  %v431 = vunpack.c.l.b16 %v83
  %v432 = vunpack.c.l.b16 %v84
  %v433 = vunpack.c.l.b16 %v85
  %v434 = vunpack.c.l.b16 %v86
  %v435 = vunpack.c.l.b16 %v87
  %v436 = vunpack.c.l.b16 %v88
  %v437 = vunpack.c.l.b16 %v89
  %v438 = vunpack.c.l.b16 %v90
  %v439 = vunpack.c.l.b16 %v91
  %v440 = vunpack.c.l.b16 %v92
  %v441 = vunpack.c.l.b16 %v93
  %v442 = vunpack.c.l.b16 %v94
  %v443 = vunpack.c.l.b16 %v95
  %v444 = vunpack.c.l.b16 %v96
  %v445 = vunpack.c.l.b16 %v97
  %v446 = vunpack.c.l.b16 %v98
  %v447 = vunpack.c.l.b16 %v99
  %v448 = vunpack.c.l.b16 %v100
  %v449 = vunpack.c.l.b16 %v101
  %v450 = vunpack.c.l.b16 %v102
  %v451 = vunpack.c.l.b16 %v103
  %v452 = vunpack.c.l.b16 %v104
  %v453 = vunpack.c.l.b16 %v105
  %v454 = vunpack.c.l.b16 %v106
  %v455 = vunpack.c.l.b16 %v107
  %v456 = vunpack.c.l.b16 %v108
  %v457 = vunpack.c.l.b16 %v109
  %v458 = vunpack.c.l.b16 %v110
  %v459 = vunpack.c.l.b16 %v111
  %v460 = vunpack.c.l.b16 %v112
  %v461 = vunpack.c.l.b16 %v113
  %v462 = vunpack.c.l.b16 %v114
  %v463 = vunpack.c.l.b16 %v115
  %v464 = vunpack.c.l.b16 %v116
  %v465 = vunpack.c.l.b16 %v117
  %v466 = vunpack.c.l.b16 %v118
  %v467 = vunpack.c.l.b16 %v119
  %v468 = vunpack.c.l.b16 %v120
  %v469 = vunpack.c.l.b16 %v121
  %v470 = vunpack.c.l.b16 %v122
  %v471 = vunpack.c.l.b16 %v123
  %v472 = vunpack.c.l.b16 %v124
  %v473 = vunpack.c.l.b16 %v125
  %v474 = vunpack.c.l.b16 %v126
  %v475 = vunpack.c.l.b16 %v127
  %v476 = vunpack.c.l.b16 %v128
  %v477 = vunpack.c.l.b16 %v129
  %v478 = vunpack.c.l.b16 %v130
  %v479 = vunpack.c.l.b16 %v131
  %v480 = vunpack.c.l.b16 %v132
  %v481 = vunpack.c.l.b16 %v133
  %v482 = vunpack.c.l.b16 %v134
  %v483 = vunpack.c.l.b16 %v135
  %v484 = vunpack.c.l.b16 %v136
  %v485 = vunpack.c.l.b16 %v137
  %v486 = vpack.c.b16 %v415, %v414
  %v487 = vpack.c.b16 %v417, %v416
  %v488 = vpack.c.b16 %v419, %v418
  %v489 = vpack.c.b16 %v421, %v420
  %v490 = vpack.c.b16 %v423, %v422
  %v491 = vpack.c.b16 %v425, %v424
  %v492 = vpack.c.b16 %v427, %v426
  %v493 = vpack.c.b16 %v429, %v428
  %v494 = vpack.c.b16 %v431, %v430
  %v495 = vpack.c.b16 %v433, %v432
  %v496 = vpack.c.b16 %v435, %v434
  %v497 = vpack.c.b16 %v437, %v436
  %v498 = vpack.c.b16 %v439, %v438
  %v499 = vpack.c.b16 %v441, %v440
  %v500 = vpack.c.b16 %v443, %v442
  %v501 = vpack.c.b16 %v445, %v444
  %v502 = vpack.c.b16 %v447, %v446
  %v503 = vpack.c.b16 %v449, %v448
  %v504 = vpack.c.b16 %v451, %v450
  %v505 = vpack.c.b16 %v453, %v452
  %v506 = vpack.c.b16 %v455, %v454
  %v507 = vpack.c.b16 %v457, %v456
  %v508 = vpack.c.b16 %v459, %v458
  %v509 = vpack.c.b16 %v461, %v460
  %v510 = vpack.c.b16 %v463, %v462
  %v511 = vpack.c.b16 %v465, %v464
  %v512 = vpack.c.b16 %v467, %v466
  %v513 = vpack.c.b16 %v469, %v468
  %v514 = vpack.c.b16 %v471, %v470
  %v515 = vpack.c.b16 %v473, %v472
  %v516 = vpack.c.b16 %v475, %v474
  %v517 = vpack.c.b16 %v477, %v476
  %v518 = vpack.c.b16 %v479, %v478
  %v519 = vpack.c.b16 %v481, %v480
  %v520 = vpack.c.b16 %v483, %v482
  %v521 = vpack.c.b16 %v485, %v484
  %vm558 = vcmask 523264
  %v560 = vsel %vm558, %v274, 0
  %v563 = vsel %vm558, %v279, 0
  %v566 = vsel %vm558, %v284, 0
  %v569 = vsel %vm558, %v289, 0
  %v572 = vsel %vm558, %v294, 0
  %v575 = vsel %vm558, %v299, 0
  %v578 = vsel %vm558, %v304, 0
  %v581 = vsel %vm558, %v309, 0
  %583 = vmatpush.bf16.msra.mxu0 %v493
  %584 = vmatpush.bf16.msra.mxu0 %v492
  %585 = vmatpush.bf16.msra.mxu0 %v491
  %586 = vmatpush.bf16.msra.mxu0 %v490
  %587 = vmatpush.bf16.msra.mxu0 %v489
  %588 = vmatpush.bf16.msra.mxu0 %v488
  %589 = vmatpush.bf16.msra.mxu0 %v487
  %590 = vmatpush.bf16.msra.mxu0 %v486
  %591 = vmatmul.bf16.gmra.mxu0 %v270
  %v592 = vpop.f32.mrf.mxu0
  %v593 = vadd.f32 %v140, %v592
  %v594 = vpop.f32.mrf.mxu0
  %v595 = vadd.f32 %v140, %v594
  %596 = vmatmul.bf16.gmra.mxu0 %v275
  %v597 = vpop.f32.mrf.mxu0
  %v598 = vadd.f32 %v140, %v597
  %v599 = vpop.f32.mrf.mxu0
  %v600 = vadd.f32 %v140, %v599
  %601 = vmatmul.bf16.gmra.mxu0 %v280
  %v602 = vpop.f32.mrf.mxu0
  %v603 = vadd.f32 %v140, %v602
  %v604 = vpop.f32.mrf.mxu0
  %v605 = vadd.f32 %v140, %v604
  %606 = vmatmul.bf16.gmra.mxu0 %v285
  %v607 = vpop.f32.mrf.mxu0
  %v608 = vadd.f32 %v140, %v607
  %v609 = vpop.f32.mrf.mxu0
  %v610 = vadd.f32 %v140, %v609
  %611 = vmatmul.bf16.gmra.mxu0 %v290
  %v612 = vpop.f32.mrf.mxu0
  %v613 = vadd.f32 %v140, %v612
  %v614 = vpop.f32.mrf.mxu0
  %v615 = vadd.f32 %v140, %v614
  %616 = vmatmul.bf16.gmra.mxu0 %v295
  %v617 = vpop.f32.mrf.mxu0
  %v618 = vadd.f32 %v140, %v617
  %v619 = vpop.f32.mrf.mxu0
  %v620 = vadd.f32 %v140, %v619
  %621 = vmatmul.bf16.gmra.mxu0 %v300
  %v622 = vpop.f32.mrf.mxu0
  %v623 = vadd.f32 %v140, %v622
  %v624 = vpop.f32.mrf.mxu0
  %v625 = vadd.f32 %v140, %v624
  %626 = vmatmul.bf16.gmra.mxu0 %v305
  %v627 = vpop.f32.mrf.mxu0
  %v628 = vadd.f32 %v140, %v627
  %v629 = vpop.f32.mrf.mxu0
  %v630 = vadd.f32 %v140, %v629
  %631 = vdwg.mxu0
  %632 = vmatpush.bf16.msra.mxu0 %v501
  %633 = vmatpush.bf16.msra.mxu0 %v500
  %634 = vmatpush.bf16.msra.mxu0 %v499
  %635 = vmatpush.bf16.msra.mxu0 %v498
  %636 = vmatpush.bf16.msra.mxu0 %v497
  %637 = vmatpush.bf16.msra.mxu0 %v496
  %638 = vmatpush.bf16.msra.mxu0 %v495
  %639 = vmatpush.bf16.msra.mxu0 %v494
  %640 = vmatmul.bf16.gmra.mxu0 %v271
  %v641 = vpop.f32.mrf.mxu0
  %v642 = vadd.f32 %v593, %v641
  %v643 = vpop.f32.mrf.mxu0
  %v644 = vadd.f32 %v595, %v643
  %645 = vmatmul.bf16.gmra.mxu0 %v276
  %v646 = vpop.f32.mrf.mxu0
  %v647 = vadd.f32 %v598, %v646
  %v648 = vpop.f32.mrf.mxu0
  %v649 = vadd.f32 %v600, %v648
  %650 = vmatmul.bf16.gmra.mxu0 %v281
  %v651 = vpop.f32.mrf.mxu0
  %v652 = vadd.f32 %v603, %v651
  %v653 = vpop.f32.mrf.mxu0
  %v654 = vadd.f32 %v605, %v653
  %655 = vmatmul.bf16.gmra.mxu0 %v286
  %v656 = vpop.f32.mrf.mxu0
  %v657 = vadd.f32 %v608, %v656
  %v658 = vpop.f32.mrf.mxu0
  %v659 = vadd.f32 %v610, %v658
  %660 = vmatmul.bf16.gmra.mxu0 %v291
  %v661 = vpop.f32.mrf.mxu0
  %v662 = vadd.f32 %v613, %v661
  %v663 = vpop.f32.mrf.mxu0
  %v664 = vadd.f32 %v615, %v663
  %665 = vmatmul.bf16.gmra.mxu0 %v296
  %v666 = vpop.f32.mrf.mxu0
  %v667 = vadd.f32 %v618, %v666
  %v668 = vpop.f32.mrf.mxu0
  %v669 = vadd.f32 %v620, %v668
  %670 = vmatmul.bf16.gmra.mxu0 %v301
  %v671 = vpop.f32.mrf.mxu0
  %v672 = vadd.f32 %v623, %v671
  %v673 = vpop.f32.mrf.mxu0
  %v674 = vadd.f32 %v625, %v673
  %675 = vmatmul.bf16.gmra.mxu0 %v306
  %v676 = vpop.f32.mrf.mxu0
  %v677 = vadd.f32 %v628, %v676
  %v678 = vpop.f32.mrf.mxu0
  %v679 = vadd.f32 %v630, %v678
  %680 = vdwg.mxu0
  %681 = vmatpush.bf16.msra.mxu0 %v509
  %682 = vmatpush.bf16.msra.mxu0 %v508
  %683 = vmatpush.bf16.msra.mxu0 %v507
  %684 = vmatpush.bf16.msra.mxu0 %v506
  %685 = vmatpush.bf16.msra.mxu0 %v505
  %686 = vmatpush.bf16.msra.mxu0 %v504
  %687 = vmatpush.bf16.msra.mxu0 %v503
  %688 = vmatpush.bf16.msra.mxu0 %v502
  %689 = vmatmul.bf16.gmra.mxu0 %v272
  %v690 = vpop.f32.mrf.mxu0
  %v691 = vadd.f32 %v642, %v690
  %v692 = vpop.f32.mrf.mxu0
  %v693 = vadd.f32 %v644, %v692
  %694 = vmatmul.bf16.gmra.mxu0 %v277
  %v695 = vpop.f32.mrf.mxu0
  %v696 = vadd.f32 %v647, %v695
  %v697 = vpop.f32.mrf.mxu0
  %v698 = vadd.f32 %v649, %v697
  %699 = vmatmul.bf16.gmra.mxu0 %v282
  %v700 = vpop.f32.mrf.mxu0
  %v701 = vadd.f32 %v652, %v700
  %v702 = vpop.f32.mrf.mxu0
  %v703 = vadd.f32 %v654, %v702
  %704 = vmatmul.bf16.gmra.mxu0 %v287
  %v705 = vpop.f32.mrf.mxu0
  %v706 = vadd.f32 %v657, %v705
  %v707 = vpop.f32.mrf.mxu0
  %v708 = vadd.f32 %v659, %v707
  %709 = vmatmul.bf16.gmra.mxu0 %v292
  %v710 = vpop.f32.mrf.mxu0
  %v711 = vadd.f32 %v662, %v710
  %v712 = vpop.f32.mrf.mxu0
  %v713 = vadd.f32 %v664, %v712
  %714 = vmatmul.bf16.gmra.mxu0 %v297
  %v715 = vpop.f32.mrf.mxu0
  %v716 = vadd.f32 %v667, %v715
  %v717 = vpop.f32.mrf.mxu0
  %v718 = vadd.f32 %v669, %v717
  %719 = vmatmul.bf16.gmra.mxu0 %v302
  %v720 = vpop.f32.mrf.mxu0
  %v721 = vadd.f32 %v672, %v720
  %v722 = vpop.f32.mrf.mxu0
  %v723 = vadd.f32 %v674, %v722
  %724 = vmatmul.bf16.gmra.mxu0 %v307
  %v725 = vpop.f32.mrf.mxu0
  %v726 = vadd.f32 %v677, %v725
  %v727 = vpop.f32.mrf.mxu0
  %v728 = vadd.f32 %v679, %v727
  %729 = vdwg.mxu0
  %730 = vmatpush.bf16.msra.mxu0 %v517
  %731 = vmatpush.bf16.msra.mxu0 %v516
  %732 = vmatpush.bf16.msra.mxu0 %v515
  %733 = vmatpush.bf16.msra.mxu0 %v514
  %734 = vmatpush.bf16.msra.mxu0 %v513
  %735 = vmatpush.bf16.msra.mxu0 %v512
  %736 = vmatpush.bf16.msra.mxu0 %v511
  %737 = vmatpush.bf16.msra.mxu0 %v510
  %738 = vmatmul.bf16.gmra.mxu0 %v273
  %v739 = vpop.f32.mrf.mxu0
  %v740 = vadd.f32 %v691, %v739
  %v741 = vpop.f32.mrf.mxu0
  %v742 = vadd.f32 %v693, %v741
  %743 = vmatmul.bf16.gmra.mxu0 %v278
  %v744 = vpop.f32.mrf.mxu0
  %v745 = vadd.f32 %v696, %v744
  %v746 = vpop.f32.mrf.mxu0
  %v747 = vadd.f32 %v698, %v746
  %748 = vmatmul.bf16.gmra.mxu0 %v283
  %v749 = vpop.f32.mrf.mxu0
  %v750 = vadd.f32 %v701, %v749
  %v751 = vpop.f32.mrf.mxu0
  %v752 = vadd.f32 %v703, %v751
  %753 = vmatmul.bf16.gmra.mxu0 %v288
  %v754 = vpop.f32.mrf.mxu0
  %v755 = vadd.f32 %v706, %v754
  %v756 = vpop.f32.mrf.mxu0
  %v757 = vadd.f32 %v708, %v756
  %758 = vmatmul.bf16.gmra.mxu0 %v293
  %v759 = vpop.f32.mrf.mxu0
  %v760 = vadd.f32 %v711, %v759
  %v761 = vpop.f32.mrf.mxu0
  %v762 = vadd.f32 %v713, %v761
  %763 = vmatmul.bf16.gmra.mxu0 %v298
  %v764 = vpop.f32.mrf.mxu0
  %v765 = vadd.f32 %v716, %v764
  %v766 = vpop.f32.mrf.mxu0
  %v767 = vadd.f32 %v718, %v766
  %768 = vmatmul.bf16.gmra.mxu0 %v303
  %v769 = vpop.f32.mrf.mxu0
  %v770 = vadd.f32 %v721, %v769
  %v771 = vpop.f32.mrf.mxu0
  %v772 = vadd.f32 %v723, %v771
  %773 = vmatmul.bf16.gmra.mxu0 %v308
  %v774 = vpop.f32.mrf.mxu0
  %v775 = vadd.f32 %v726, %v774
  %v776 = vpop.f32.mrf.mxu0
  %v777 = vadd.f32 %v728, %v776
  %778 = vdwg.mxu0
  %779 = vmatpush.bf16.msra.mxu0 0
  %780 = vmatpush.bf16.msra.mxu0 0
  %781 = vmatpush.bf16.msra.mxu0 0
  %782 = vmatpush.bf16.msra.mxu0 0
  %783 = vmatpush.bf16.msra.mxu0 %v521
  %784 = vmatpush.bf16.msra.mxu0 %v520
  %785 = vmatpush.bf16.msra.mxu0 %v519
  %786 = vmatpush.bf16.msra.mxu0 %v518
  %787 = vmatmul.bf16.gmra.mxu0 %v560
  %v788 = vpop.f32.mrf.mxu0
  %v789 = vadd.f32 %v740, %v788
  %v790 = vpop.f32.mrf.mxu0
  %v791 = vadd.f32 %v742, %v790
  %792 = vmatmul.bf16.gmra.mxu0 %v563
  %v793 = vpop.f32.mrf.mxu0
  %v794 = vadd.f32 %v745, %v793
  %v795 = vpop.f32.mrf.mxu0
  %v796 = vadd.f32 %v747, %v795
  %797 = vmatmul.bf16.gmra.mxu0 %v566
  %v798 = vpop.f32.mrf.mxu0
  %v799 = vadd.f32 %v750, %v798
  %v800 = vpop.f32.mrf.mxu0
  %v801 = vadd.f32 %v752, %v800
  %802 = vmatmul.bf16.gmra.mxu0 %v569
  %v803 = vpop.f32.mrf.mxu0
  %v804 = vadd.f32 %v755, %v803
  %v805 = vpop.f32.mrf.mxu0
  %v806 = vadd.f32 %v757, %v805
  %807 = vmatmul.bf16.gmra.mxu0 %v572
  %v808 = vpop.f32.mrf.mxu0
  %v809 = vadd.f32 %v760, %v808
  %v810 = vpop.f32.mrf.mxu0
  %v811 = vadd.f32 %v762, %v810
  %812 = vmatmul.bf16.gmra.mxu0 %v575
  %v813 = vpop.f32.mrf.mxu0
  %v814 = vadd.f32 %v765, %v813
  %v815 = vpop.f32.mrf.mxu0
  %v816 = vadd.f32 %v767, %v815
  %817 = vmatmul.bf16.gmra.mxu0 %v578
  %v818 = vpop.f32.mrf.mxu0
  %v819 = vadd.f32 %v770, %v818
  %v820 = vpop.f32.mrf.mxu0
  %v821 = vadd.f32 %v772, %v820
  %822 = vmatmul.bf16.gmra.mxu0 %v581
  %v823 = vpop.f32.mrf.mxu0
  %v824 = vadd.f32 %v775, %v823
  %v825 = vpop.f32.mrf.mxu0
  %v826 = vadd.f32 %v777, %v825
  %827 = vdwg.mxu0
  %828 = vst.msk [vmem:[%s3] sm:$0xff] %vm558, %v789
  %829 = vst.msk [vmem:[%s3 + $0x8] sm:$0xff] %vm558, %v791
  %830 = vst.msk [vmem:[%s3 + $0x10] sm:$0xff] %vm558, %v794
  %831 = vst.msk [vmem:[%s3 + $0x18] sm:$0xff] %vm558, %v796
  %832 = vst.msk [vmem:[%s3 + $0x20] sm:$0xff] %vm558, %v799
  %833 = vst.msk [vmem:[%s3 + $0x28] sm:$0xff] %vm558, %v801
  %834 = vst.msk [vmem:[%s3 + $0x30] sm:$0xff] %vm558, %v804
  %835 = vst.msk [vmem:[%s3 + $0x38] sm:$0xff] %vm558, %v806
  %836 = vst.msk [vmem:[%s3 + $0x40] sm:$0xff] %vm558, %v809
  %837 = vst.msk [vmem:[%s3 + $0x48] sm:$0xff] %vm558, %v811
  %838 = vst.msk [vmem:[%s3 + $0x50] sm:$0xff] %vm558, %v814
  %839 = vst.msk [vmem:[%s3 + $0x58] sm:$0xff] %vm558, %v816
  %840 = vst.msk [vmem:[%s3 + $0x60] sm:$0xff] %vm558, %v819
  %841 = vst.msk [vmem:[%s3 + $0x68] sm:$0xff] %vm558, %v821
  %842 = vst.msk [vmem:[%s3 + $0x70] sm:$0xff] %vm558, %v824
  %843 = vst.msk [vmem:[%s3 + $0x78] sm:$0xff] %vm558, %v826
  %s844 = smul.u32 0, 128
  %v845 = vlaneseq
  %v846 = vshrl.u32 %v845, 7
  %v847 = vadd.s32 %v846, 8
  %v848 = vadd.s32 %v846, 16
  %v849 = vadd.s32 %v846, 24
  %v850 = vadd.s32 %v846, 32
  %v851 = vadd.s32 %v846, 40
  %v852 = vadd.s32 %v846, 48
  %v853 = vadd.s32 %v846, 56
  %v854 = vadd.s32 %v846, 64
  %v855 = vadd.s32 %v846, 72
  %v856 = vadd.s32 %v846, 80
  %v857 = vadd.s32 %v846, 88
  %v858 = vadd.s32 %v846, 96
  %v859 = vadd.s32 %v846, 104
  %v860 = vadd.s32 %v846, 112
  %v861 = vadd.s32 %v846, 120
  %v862 = vstv %s844
  %v863 = vadd.s32 %v862, %v846
  %v864 = vadd.s32 %v862, %v847
  %v865 = vadd.s32 %v862, %v848
  %v866 = vadd.s32 %v862, %v849
  %v867 = vadd.s32 %v862, %v850
  %v868 = vadd.s32 %v862, %v851
  %v869 = vadd.s32 %v862, %v852
  %v870 = vadd.s32 %v862, %v853
  %v871 = vadd.s32 %v862, %v854
  %v872 = vadd.s32 %v862, %v855
  %v873 = vadd.s32 %v862, %v856
  %v874 = vadd.s32 %v862, %v857
  %v875 = vadd.s32 %v862, %v858
  %v876 = vadd.s32 %v862, %v859
  %v877 = vadd.s32 %v862, %v860
  %v878 = vadd.s32 %v862, %v861
  %vm879 = vcmp.lt.s32.totalorder %v863, 128
  %vm880 = vcmp.lt.s32.totalorder %v864, 128
  %vm881 = vcmp.lt.s32.totalorder %v865, 128
  %vm882 = vcmp.lt.s32.totalorder %v866, 128
  %vm883 = vcmp.lt.s32.totalorder %v867, 128
  %vm884 = vcmp.lt.s32.totalorder %v868, 128
  %vm885 = vcmp.lt.s32.totalorder %v869, 128
  %vm886 = vcmp.lt.s32.totalorder %v870, 128
  %vm887 = vcmp.lt.s32.totalorder %v871, 128
  %vm888 = vcmp.lt.s32.totalorder %v872, 128
  %vm889 = vcmp.lt.s32.totalorder %v873, 128
  %vm890 = vcmp.lt.s32.totalorder %v874, 128
  %vm891 = vcmp.lt.s32.totalorder %v875, 128
  %vm892 = vcmp.lt.s32.totalorder %v876, 128
  %vm893 = vcmp.lt.s32.totalorder %v877, 128
  %vm894 = vcmp.lt.s32.totalorder %v878, 128
  %v895 = vsel %vm879, 1, 0
  %v896 = vsel %vm880, 1, 0
  %v897 = vsel %vm881, 1, 0
  %v898 = vsel %vm882, 1, 0
  %v899 = vsel %vm883, 1, 0
  %v900 = vsel %vm884, 1, 0
  %v901 = vsel %vm885, 1, 0
  %v902 = vsel %vm886, 1, 0
  %v903 = vsel %vm887, 1, 0
  %v904 = vsel %vm888, 1, 0
  %v905 = vsel %vm889, 1, 0
  %v906 = vsel %vm890, 1, 0
  %v907 = vsel %vm891, 1, 0
  %v908 = vsel %vm892, 1, 0
  %v909 = vsel %vm893, 1, 0
  %v910 = vsel %vm894, 1, 0
  %v911 = vcvt.s32.f32 %v895
  %v912 = vcvt.s32.f32 %v896
  %v913 = vcvt.s32.f32 %v897
  %v914 = vcvt.s32.f32 %v898
  %v915 = vcvt.s32.f32 %v899
  %v916 = vcvt.s32.f32 %v900
  %v917 = vcvt.s32.f32 %v901
  %v918 = vcvt.s32.f32 %v902
  %v919 = vcvt.s32.f32 %v903
  %v920 = vcvt.s32.f32 %v904
  %v921 = vcvt.s32.f32 %v905
  %v922 = vcvt.s32.f32 %v906
  %v923 = vcvt.s32.f32 %v907
  %v924 = vcvt.s32.f32 %v908
  %v925 = vcvt.s32.f32 %v909
  %v926 = vcvt.s32.f32 %v910
  %v927 = vmul.f32 %v789, %v911
  %v928 = vmul.f32 %v791, %v912
  %v929 = vmul.f32 %v794, %v913
  %v930 = vmul.f32 %v796, %v914
  %v931 = vmul.f32 %v799, %v915
  %v932 = vmul.f32 %v801, %v916
  %v933 = vmul.f32 %v804, %v917
  %v934 = vmul.f32 %v806, %v918
  %v935 = vmul.f32 %v809, %v919
  %v936 = vmul.f32 %v811, %v920
  %v937 = vmul.f32 %v814, %v921
  %v938 = vmul.f32 %v816, %v922
  %v939 = vmul.f32 %v819, %v923
  %v940 = vmul.f32 %v821, %v924
  %v941 = vmul.f32 %v824, %v925
  %v942 = vmul.f32 %v826, %v926
  %v943 = vsel %vm558, %v927, 0.0
  %v944 = vsel %vm558, %v928, 0.0
  %v945 = vadd.f32 %v943, %v944
  %v946 = vsel %vm558, %v929, 0.0
  %v947 = vadd.f32 %v945, %v946
  %v948 = vsel %vm558, %v930, 0.0
  %v949 = vadd.f32 %v947, %v948
  %v950 = vsel %vm558, %v931, 0.0
  %v951 = vadd.f32 %v949, %v950
  %v952 = vsel %vm558, %v932, 0.0
  %v953 = vadd.f32 %v951, %v952
  %v954 = vsel %vm558, %v933, 0.0
  %v955 = vadd.f32 %v953, %v954
  %v956 = vsel %vm558, %v934, 0.0
  %v957 = vadd.f32 %v955, %v956
  %v958 = vsel %vm558, %v935, 0.0
  %v959 = vadd.f32 %v957, %v958
  %v960 = vsel %vm558, %v936, 0.0
  %v961 = vadd.f32 %v959, %v960
  %v962 = vsel %vm558, %v937, 0.0
  %v963 = vadd.f32 %v961, %v962
  %v964 = vsel %vm558, %v938, 0.0
  %v965 = vadd.f32 %v963, %v964
  %v966 = vsel %vm558, %v939, 0.0
  %v967 = vadd.f32 %v965, %v966
  %v968 = vsel %vm558, %v940, 0.0
  %v969 = vadd.f32 %v967, %v968
  %v970 = vsel %vm558, %v941, 0.0
  %v971 = vadd.f32 %v969, %v970
  %v972 = vsel %vm558, %v942, 0.0
  %v973 = vadd.f32 %v971, %v972
  %v974 = vrot.slane %v973, 4
  %v975 = vadd.f32 %v973, %v974
  %v976 = vrot.slane %v975, 2
  %v977 = vadd.f32 %v975, %v976
  %v978 = vrot.slane %v977, 1
  %v979 = vadd.f32 %v977, %v978
  %vm980 = vcmask 516096
  %981 = vst.msk [vmem:[%s4] sm:$0x1] %vm980, %v979
  %v982 = vmul.f32 %v927, %v927
  %v983 = vmul.f32 %v928, %v928
  %v984 = vmul.f32 %v929, %v929
  %v985 = vmul.f32 %v930, %v930
  %v986 = vmul.f32 %v931, %v931
  %v987 = vmul.f32 %v932, %v932
  %v988 = vmul.f32 %v933, %v933
  %v989 = vmul.f32 %v934, %v934
  %v990 = vmul.f32 %v935, %v935
  %v991 = vmul.f32 %v936, %v936
  %v992 = vmul.f32 %v937, %v937
  %v993 = vmul.f32 %v938, %v938
  %v994 = vmul.f32 %v939, %v939
  %v995 = vmul.f32 %v940, %v940
  %v996 = vmul.f32 %v941, %v941
  %v997 = vmul.f32 %v942, %v942
  %v998 = vsel %vm558, %v982, 0.0
  %v999 = vsel %vm558, %v983, 0.0
  %v1000 = vadd.f32 %v998, %v999
  %v1001 = vsel %vm558, %v984, 0.0
  %v1002 = vadd.f32 %v1000, %v1001
  %v1003 = vsel %vm558, %v985, 0.0
  %v1004 = vadd.f32 %v1002, %v1003
  %v1005 = vsel %vm558, %v986, 0.0
  %v1006 = vadd.f32 %v1004, %v1005
  %v1007 = vsel %vm558, %v987, 0.0
  %v1008 = vadd.f32 %v1006, %v1007
  %v1009 = vsel %vm558, %v988, 0.0
  %v1010 = vadd.f32 %v1008, %v1009
  %v1011 = vsel %vm558, %v989, 0.0
  %v1012 = vadd.f32 %v1010, %v1011
  %v1013 = vsel %vm558, %v990, 0.0
  %v1014 = vadd.f32 %v1012, %v1013
  %v1015 = vsel %vm558, %v991, 0.0
  %v1016 = vadd.f32 %v1014, %v1015
  %v1017 = vsel %vm558, %v992, 0.0
  %v1018 = vadd.f32 %v1016, %v1017
  %v1019 = vsel %vm558, %v993, 0.0
  %v1020 = vadd.f32 %v1018, %v1019
  %v1021 = vsel %vm558, %v994, 0.0
  %v1022 = vadd.f32 %v1020, %v1021
  %v1023 = vsel %vm558, %v995, 0.0
  %v1024 = vadd.f32 %v1022, %v1023
  %v1025 = vsel %vm558, %v996, 0.0
  %v1026 = vadd.f32 %v1024, %v1025
  %v1027 = vsel %vm558, %v997, 0.0
  %v1028 = vadd.f32 %v1026, %v1027
  %v1029 = vrot.slane %v1028, 4
  %v1030 = vadd.f32 %v1028, %v1029
  %v1031 = vrot.slane %v1030, 2
  %v1032 = vadd.f32 %v1030, %v1031
  %v1033 = vrot.slane %v1032, 1
  %v1034 = vadd.f32 %v1032, %v1033
  %1035 = vst.msk [vmem:[%s5] sm:$0x1] %vm980, %v1034
  // Predicated region
  $region14: #{_lambda_.9} parent=0 // pred_check
    _
  $region15: #{_lambda_.9} parent=0 // pred_check_branch
    %1037 = sbr.rel (0) target = $region17
  $region16: #{_lambda_.9} parent=0 // pred_region
    _
  $region17: #{_lambda_.9} parent=0 // pred_fallthru
    _
  // Predicated region
  $region18: #{_lambda_.9} parent=0 // pred_check
    _
  $region19: #{_lambda_.9} parent=0 // pred_check_branch
    %1039 = sbr.rel (0) target = $region21
  $region20: #{_lambda_.9} parent=0 // pred_region
    _
  $region21: #{_lambda_.9} parent=0 // pred_fallthru
    _
  // Predicated region
  $region22: #{_lambda_.9} parent=0 // pred_check
    _
  $region23: #{_lambda_.9} parent=0 // pred_check_branch
    %1041 = sbr.rel (0) target = $region25
  $region24: #{_lambda_.9} parent=0 // pred_region
    _
  $region25: #{_lambda_.9} parent=0 // pred_fallthru
    _
  // Predicated region
  $region26: #{_lambda_.9} parent=0 // pred_check
    _
  $region27: #{_lambda_.9} parent=0 // pred_check_branch
    %1043 = sbr.rel (0) target = $region29
  $region28: #{_lambda_.9} parent=0 // pred_region
    _
  $region29: #{_lambda_.9} parent=0 // pred_fallthru
    _
  // Predicated region
  $region30: #{_lambda_.9} parent=0 // pred_check
    _
  $region31: #{_lambda_.9} parent=0 // pred_check_branch
    %1045 = sbr.rel (0) target = $region33
  $region32: #{_lambda_.9} parent=0 // pred_region
    _
  $region33: #{_lambda_.9} parent=0 // pred_fallthru
    _
  // Predicated region
  $region34: #{_lambda_.9} parent=0 // pred_check
    _
  $region35: #{_lambda_.9} parent=0 // pred_check_branch
    %1047 = sbr.rel (0) target = $region37
  $region36: #{_lambda_.9} parent=0 // pred_region
    _
  $region37: #{_lambda_.9} parent=0 // pred_fallthru
    _

</llo_original>
